<compile_context>
chip_gen: v5e
topology: v5e:2x2
jax: 0.10.0
libtpu: 0.0.40
codegen_flags: <defaults>
</compile_context>

<pallas_src>
import functools

import jax
import jax.numpy as jnp
from jax.experimental import pallas as pl
from jax.experimental.pallas import tpu as pltpu


# ---------------------------------------------------------------------------
# Kernel 1: hoisted, sequence-wide input projection  xp = x @ W_ih^T + b
# ---------------------------------------------------------------------------
def _proj_kernel(x_ref, w_ref, b_ref, o_ref):
    o_ref[...] = (
        jnp.dot(x_ref[...], w_ref[...], preferred_element_type=jnp.float32)
        + b_ref[...]
    ).astype(o_ref.dtype)


def _pick_row_tile(rows, max_tile=512):
    if rows <= max_tile:
        return rows
    for t in range(max_tile, 0, -8):
        if t % 8 == 0 and rows % t == 0:
            return t
    return rows


def _input_proj(x2, w_ih_t, b):
    # x2: (rows, D) with rows = S*B (seq-major flattening); returns (rows, 4H).
    rows, d = x2.shape
    g = w_ih_t.shape[1]
    rt = _pick_row_tile(rows)
    return pl.pallas_call(
        _proj_kernel,
        out_shape=jax.ShapeDtypeStruct((rows, g), jnp.float32),
        grid_spec=pltpu.PrefetchScalarGridSpec(
            num_scalar_prefetch=0,
            grid=(rows // rt,),
            in_specs=[
                pl.BlockSpec((rt, d), lambda r: (r, 0)),
                pl.BlockSpec((d, g), lambda r: (0, 0)),
                pl.BlockSpec((1, g), lambda r: (0, 0)),
            ],
            out_specs=pl.BlockSpec((rt, g), lambda r: (r, 0)),
        ),
        compiler_params=pltpu.CompilerParams(
            dimension_semantics=("parallel",)),
    )(x2, w_ih_t, b)


# ---------------------------------------------------------------------------
# Kernel 2: the recurrence.  Tc timesteps per grid step; only h @ W_hh^T plus
# gate nonlinearities on the serial path.  Optionally fuses the final Linear.
# ---------------------------------------------------------------------------
def _lstm_recurrent_kernel(fuse_fc, *refs):
    if fuse_fc:
        (xp_ref, whh_hbm, wfc_ref, bfc_ref, out_ref,
         whh_sc, h_sc, c_sc, sem) = refs
        hseq_ref = None
    else:
        (xp_ref, whh_hbm, hseq_ref, whh_sc, h_sc, c_sc, sem) = refs
        wfc_ref = bfc_ref = out_ref = None

    t = pl.program_id(0)
    tc = xp_ref.shape[0]
    h_dim = h_sc.shape[-1]

    @pl.when(t == 0)
    def _():
        # h0 = c0 = 0, and land W_hh^T in VMEM once; it stays resident
        # (single-buffered) for the whole sequence.
        h_sc[...] = jnp.zeros_like(h_sc)
        c_sc[...] = jnp.zeros_like(c_sc)
        cp = pltpu.make_async_copy(whh_hbm, whh_sc, sem.at[0])
        cp.start()
        cp.wait()

    whh = whh_sc[...]
    h = h_sc[...]
    c = c_sc[...]

    # Fully unrolled chunk of Tc recurrent steps (static indices -> static
    # loads/stores along the leading time axis of the block).
    for tt in range(tc):
        gates = xp_ref[tt] + jnp.dot(h, whh, preferred_element_type=jnp.float32)
        i_g = jax.nn.sigmoid(gates[:, 0 * h_dim:1 * h_dim])
        f_g = jax.nn.sigmoid(gates[:, 1 * h_dim:2 * h_dim])
        g_g = jnp.tanh(gates[:, 2 * h_dim:3 * h_dim])
        o_g = jax.nn.sigmoid(gates[:, 3 * h_dim:4 * h_dim])
        c = f_g * c + i_g * g_g
        h = o_g * jnp.tanh(c)
        if not fuse_fc:
            hseq_ref[tt] = h.astype(hseq_ref.dtype)

    h_sc[...] = h
    c_sc[...] = c

    if fuse_fc:
        # Final Linear fused onto the last timestep's hidden state; the last
        # layer's hidden sequence is never written to HBM.
        @pl.when(t == pl.num_programs(0) - 1)
        def _():
            out_ref[...] = (
                jnp.dot(h, wfc_ref[...], preferred_element_type=jnp.float32)
                + bfc_ref[...]
            ).astype(out_ref.dtype)


def _pick_time_chunk(seq_len, max_chunk=16):
    for t in range(min(seq_len, max_chunk), 0, -1):
        if seq_len % t == 0:
            return t
    return 1


def _lstm_recurrent(xp, w_hh_t, fc=None):
    # xp: (S, B, 4H) precomputed input projection (bias already folded in).
    s, b, g = xp.shape
    h_dim = w_hh_t.shape[0]
    tc = _pick_time_chunk(s)
    n_chunks = s // tc

    in_specs = [
        pl.BlockSpec((tc, b, g), lambda t: (t, 0, 0)),
        pl.BlockSpec(memory_space=pl.ANY),            # W_hh^T: one-time copy to VMEM
    ]
    args = [xp, w_hh_t]
    if fc is None:
        out_shape = jax.ShapeDtypeStruct((s, b, h_dim), jnp.float32)
        out_specs = pl.BlockSpec((tc, b, h_dim), lambda t: (t, 0, 0))
    else:
        w_fc_t, b_fc = fc
        o_dim = w_fc_t.shape[1]
        in_specs += [
            pl.BlockSpec((h_dim, o_dim), lambda t: (0, 0)),
            pl.BlockSpec((1, o_dim), lambda t: (0, 0)),
        ]
        args += [w_fc_t, b_fc]
        out_shape = jax.ShapeDtypeStruct((b, o_dim), jnp.float32)
        out_specs = pl.BlockSpec((b, o_dim), lambda t: (0, 0))

    return pl.pallas_call(
        functools.partial(_lstm_recurrent_kernel, fc is not None),
        out_shape=out_shape,
        grid_spec=pltpu.PrefetchScalarGridSpec(
            num_scalar_prefetch=0,
            grid=(n_chunks,),
            in_specs=in_specs,
            out_specs=out_specs,
            scratch_shapes=[
                pltpu.VMEM((h_dim, g), jnp.float32),   # resident W_hh^T
                pltpu.VMEM((b, h_dim), jnp.float32),   # h state
                pltpu.VMEM((b, h_dim), jnp.float32),   # c state
                pltpu.SemaphoreType.DMA((1,)),
            ],
        ),
        compiler_params=pltpu.CompilerParams(
            # Time is inherently sequential (h/c scratch carries across steps):
            # this axis must stay "arbitrary".
            dimension_semantics=("arbitrary",)),
    )(*args)


# ---------------------------------------------------------------------------
# Parameters + forward
# ---------------------------------------------------------------------------
def init_params(key, input_dim, hidden_dim, num_layers, output_dim):
    """PyTorch-style U(-1/sqrt(H), 1/sqrt(H)) init, weights stored transposed."""
    params = {"lstm": [], "fc": {}}
    k = 1.0 / jnp.sqrt(hidden_dim)
    keys = jax.random.split(key, num_layers * 4 + 2)
    idx = 0
    for layer in range(num_layers):
        d_in = input_dim if layer == 0 else hidden_dim
        w_ih = jax.random.uniform(keys[idx], (4 * hidden_dim, d_in),
                                  minval=-k, maxval=k, dtype=jnp.float32); idx += 1
        w_hh = jax.random.uniform(keys[idx], (4 * hidden_dim, hidden_dim),
                                  minval=-k, maxval=k, dtype=jnp.float32); idx += 1
        b_ih = jax.random.uniform(keys[idx], (4 * hidden_dim,),
                                  minval=-k, maxval=k, dtype=jnp.float32); idx += 1
        b_hh = jax.random.uniform(keys[idx], (4 * hidden_dim,),
                                  minval=-k, maxval=k, dtype=jnp.float32); idx += 1
        params["lstm"].append({
            "w_ih_t": w_ih.T,                       # (d_in, 4H)
            "w_hh_t": w_hh.T,                       # (H, 4H)
            "b": (b_ih + b_hh).reshape(1, -1),      # (1, 4H)
        })
    w_fc = jax.random.uniform(keys[idx], (output_dim, hidden_dim),
                              minval=-k, maxval=k, dtype=jnp.float32); idx += 1
    b_fc = jax.random.uniform(keys[idx], (output_dim,),
                              minval=-k, maxval=k, dtype=jnp.float32)
    params["fc"]["w_t"] = w_fc.T                    # (H, out_dim)
    params["fc"]["b"] = b_fc.reshape(1, -1)         # (1, out_dim)
    return params


@jax.jit
def lstm_forward(params, x):
    # x: (batch, seq, input_dim), batch_first like the PyTorch module.
    # Single small transpose of x to seq-major; all intermediate activations are
    # produced seq-major by the kernels, so there are no transposes between layers.
    h_seq = jnp.transpose(x, (1, 0, 2)).astype(jnp.float32)    # (S, B, D)
    num_layers = len(params["lstm"])
    out = None
    for li, lp in enumerate(params["lstm"]):
        s, bsz, d_in = h_seq.shape
        xp = _input_proj(h_seq.reshape(s * bsz, d_in), lp["w_ih_t"], lp["b"])
        xp = xp.reshape(s, bsz, -1)                            # (S, B, 4H), free reshape
        if li == num_layers - 1:
            out = _lstm_recurrent(
                xp, lp["w_hh_t"],
                fc=(params["fc"]["w_t"], params["fc"]["b"]))   # (B, out_dim)
        else:
            h_seq = _lstm_recurrent(xp, lp["w_hh_t"])          # (S, B, H)
    return out


def _reference_forward(params, x):
    """Pure-JAX reference (same math, no Pallas) for a numerics sanity check."""
    h_seq = jnp.transpose(x, (1, 0, 2)).astype(jnp.float32)
    for lp in params["lstm"]:
        h_dim = lp["w_hh_t"].shape[0]
        bsz = h_seq.shape[1]

        def step(carry, x_t, lp=lp, h_dim=h_dim):
            h, c = carry
            gates = x_t @ lp["w_ih_t"] + h @ lp["w_hh_t"] + lp["b"]
            i_g = jax.nn.sigmoid(gates[:, 0 * h_dim:1 * h_dim])
            f_g = jax.nn.sigmoid(gates[:, 1 * h_dim:2 * h_dim])
            g_g = jnp.tanh(gates[:, 2 * h_dim:3 * h_dim])
            o_g = jax.nn.sigmoid(gates[:, 3 * h_dim:4 * h_dim])
            c = f_g * c + i_g * g_g
            h = o_g * jnp.tanh(c)
            return (h, c), h

        init = (jnp.zeros((bsz, h_dim), jnp.float32),
                jnp.zeros((bsz, h_dim), jnp.float32))
        _, h_seq = jax.lax.scan(step, init, h_seq)
    return h_seq[-1] @ params["fc"]["w_t"] + params["fc"]["b"]


if __name__ == "__main__":
    batch, seq, input_dim, hidden_dim, num_layers, output_dim = 2, 8, 4, 32, 2, 3

    key = jax.random.PRNGKey(0)
    k_params, k_x = jax.random.split(key)
    params = init_params(k_params, input_dim, hidden_dim, num_layers, output_dim)
    x = jax.random.normal(k_x, (batch, seq, input_dim), dtype=jnp.float32)

    out = lstm_forward(params, x)
    jax.block_until_ready(out)
    assert out.shape == (batch, output_dim)

    ref = _reference_forward(params, x)
    assert jnp.allclose(out, ref, atol=1e-3, rtol=1e-3), (out, ref)

    print("KERNEL_OK")
</pallas_src>

<mosaic_0001>
module attributes {stable_mosaic.version = 11 : i64} {
  func.func @_proj_kernel(%arg0: i32, %arg1: memref<16x32xf32, #tpu.memory_space<vmem>>, %arg2: memref<32x128xf32, #tpu.memory_space<vmem>>, %arg3: memref<1x128xf32, #tpu.memory_space<vmem>>, %arg4: memref<16x128xf32, #tpu.memory_space<vmem>>) attributes {dimension_semantics = [#tpu.dimension_semantics<parallel>], iteration_bounds = array<i64: 1>, scalar_prefetch = 0 : i64, scratch_operands = 0 : i64, tpu.core_type = #tpu.core_type<tc>, window_params = [{transform_indices = @transform_0, window_bounds = array<i64: 16, 32>}, {pipeline_mode = #tpu.pipeline_mode<synchronous>, transform_indices = @transform_1, window_bounds = array<i64: 32, 128>}, {pipeline_mode = #tpu.pipeline_mode<synchronous>, transform_indices = @transform_2, window_bounds = array<i64: 1, 128>}, {transform_indices = @transform_3, window_bounds = array<i64: 16, 128>}]} {
    %c0 = arith.constant 0 : index
    %c0_0 = arith.constant 0 : index
    %0 = vector.load %arg1[%c0, %c0_0] : memref<16x32xf32, #tpu.memory_space<vmem>>, vector<16x32xf32>
    %c0_1 = arith.constant 0 : index
    %c0_2 = arith.constant 0 : index
    %1 = vector.load %arg2[%c0_1, %c0_2] : memref<32x128xf32, #tpu.memory_space<vmem>>, vector<32x128xf32>
    %cst = arith.constant dense<0.000000e+00> : vector<16x128xf32>
    %2 = tpu.matmul %0, %1, %cst {dimension_numbers = #tpu.dot_dimension_numbers<[1], [0], [0], [1], [0, 0, 1, 1], [], []>} : vector<16x32xf32>, vector<32x128xf32>, vector<16x128xf32> -> vector<16x128xf32>
    %c0_3 = arith.constant 0 : index
    %c0_4 = arith.constant 0 : index
    %3 = vector.load %arg3[%c0_3, %c0_4] : memref<1x128xf32, #tpu.memory_space<vmem>>, vector<1x128xf32>
    %4 = vector.broadcast %3 : vector<1x128xf32> to vector<16x128xf32>
    %5 = arith.addf %2, %4 : vector<16x128xf32>
    %c0_5 = arith.constant 0 : index
    %c0_6 = arith.constant 0 : index
    %6 = vector.load %arg4[%c0_5, %c0_6] : memref<16x128xf32, #tpu.memory_space<vmem>>, vector<16x128xf32>
    tpu.vector_store %arg4[%c0_5, %c0_6], %5 {strides = array<i32>} : memref<16x128xf32, #tpu.memory_space<vmem>>, vector<16x128xf32>,
    return
  }
  func.func @transform_0(%arg0: i32) -> (i32, i32) {
    %c0_i32 = arith.constant 0 : i32
    %c0_i32_0 = arith.constant 0 : i32
    return %arg0, %c0_i32 : i32, i32
  }
  func.func @transform_1(%arg0: i32) -> (i32, i32) {
    %c0_i32 = arith.constant 0 : i32
    %c0_i32_0 = arith.constant 0 : i32
    %c0_i32_1 = arith.constant 0 : i32
    return %c0_i32, %c0_i32_0 : i32, i32
  }
  func.func @transform_2(%arg0: i32) -> (i32, i32) {
    %c0_i32 = arith.constant 0 : i32
    %c0_i32_0 = arith.constant 0 : i32
    %c0_i32_1 = arith.constant 0 : i32
    return %c0_i32, %c0_i32_0 : i32, i32
  }
  func.func @transform_3(%arg0: i32) -> (i32, i32) {
    %c0_i32 = arith.constant 0 : i32
    %c0_i32_0 = arith.constant 0 : i32
    return %arg0, %c0_i32 : i32, i32
  }
}

module attributes {stable_mosaic.version = 11 : i64} {
  func.func @_lstm_recurrent_kernel(%arg0: i32, %arg1: memref<8x2x128xf32, #tpu.memory_space<vmem>>, %arg2: memref<32x128xf32, #tpu.memory_space<any>>, %arg3: memref<8x2x32xf32, #tpu.memory_space<vmem>>, %arg4: memref<32x128xf32, #tpu.memory_space<vmem>>, %arg5: memref<2x32xf32, #tpu.memory_space<vmem>>, %arg6: memref<2x32xf32, #tpu.memory_space<vmem>>, %arg7: memref<1x!tpu.dma_semaphore, #tpu.memory_space<semaphore_mem>>) attributes {dimension_semantics = [#tpu.dimension_semantics<arbitrary>], iteration_bounds = array<i64: 1>, scalar_prefetch = 0 : i64, scratch_operands = 4 : i64, tpu.core_type = #tpu.core_type<tc>, window_params = [{transform_indices = @transform_0, window_bounds = array<i64: 8, 2, 128>}, {}, {transform_indices = @transform_2, window_bounds = array<i64: 8, 2, 32>}]} {
    %c0_i32 = arith.constant 0 : i32
    %0 = arith.cmpi eq, %arg0, %c0_i32 : i32
    %1 = arith.extui %0 : i1 to i32
    %c0_i32_0 = arith.constant 0 : i32
    %2 = arith.cmpi ne, %1, %c0_i32_0 : i32
    scf.if %2 {
      %cst_82 = arith.constant 0.000000e+00 : f32
      %264 = vector.broadcast %cst_82 : f32 to vector<2x32xf32>
      %c0_83 = arith.constant 0 : index
      %c0_84 = arith.constant 0 : index
      %265 = vector.load %arg5[%c0_83, %c0_84] : memref<2x32xf32, #tpu.memory_space<vmem>>, vector<2x32xf32>
      tpu.vector_store %arg5[%c0_83, %c0_84], %264 {strides = array<i32>} : memref<2x32xf32, #tpu.memory_space<vmem>>, vector<2x32xf32>,
      %cst_85 = arith.constant 0.000000e+00 : f32
      %266 = vector.broadcast %cst_85 : f32 to vector<2x32xf32>
      %c0_86 = arith.constant 0 : index
      %c0_87 = arith.constant 0 : index
      %267 = vector.load %arg6[%c0_86, %c0_87] : memref<2x32xf32, #tpu.memory_space<vmem>>, vector<2x32xf32>
      tpu.vector_store %arg6[%c0_86, %c0_87], %266 {strides = array<i32>} : memref<2x32xf32, #tpu.memory_space<vmem>>, vector<2x32xf32>,
      %c0_i32_88 = arith.constant 0 : i32
      %268 = tpu.memref_slice %arg7[%c0_i32_88] : memref<1x!tpu.dma_semaphore, #tpu.memory_space<semaphore_mem>> -> memref<1x!tpu.dma_semaphore, #tpu.memory_space<semaphore_mem>>
      %269 = tpu.memref_squeeze %268 : memref<1x!tpu.dma_semaphore, #tpu.memory_space<semaphore_mem>> -> memref<!tpu.dma_semaphore, #tpu.memory_space<semaphore_mem>>
      tpu.enqueue_dma source(%arg2 : memref<32x128xf32, #tpu.memory_space<any>>) target(%arg4 : memref<32x128xf32, #tpu.memory_space<vmem>>) target_semaphore(%269 : memref<!tpu.dma_semaphore, #tpu.memory_space<semaphore_mem>>)
      %c0_i32_89 = arith.constant 0 : i32
      %270 = tpu.memref_slice %arg7[%c0_i32_89] : memref<1x!tpu.dma_semaphore, #tpu.memory_space<semaphore_mem>> -> memref<1x!tpu.dma_semaphore, #tpu.memory_space<semaphore_mem>>
      %271 = tpu.memref_squeeze %270 : memref<1x!tpu.dma_semaphore, #tpu.memory_space<semaphore_mem>> -> memref<!tpu.dma_semaphore, #tpu.memory_space<semaphore_mem>>
      tpu.wait_dma2 semaphore(%271 : memref<!tpu.dma_semaphore, #tpu.memory_space<semaphore_mem>>) src(%arg2 : memref<32x128xf32, #tpu.memory_space<any>>) dst(%arg4 : memref<32x128xf32, #tpu.memory_space<vmem>>)
    } else {
    }
    %c0 = arith.constant 0 : index
    %c0_1 = arith.constant 0 : index
    %3 = vector.load %arg4[%c0, %c0_1] : memref<32x128xf32, #tpu.memory_space<vmem>>, vector<32x128xf32>
    %c0_2 = arith.constant 0 : index
    %c0_3 = arith.constant 0 : index
    %4 = vector.load %arg5[%c0_2, %c0_3] : memref<2x32xf32, #tpu.memory_space<vmem>>, vector<2x32xf32>
    %c0_4 = arith.constant 0 : index
    %c0_5 = arith.constant 0 : index
    %5 = vector.load %arg6[%c0_4, %c0_5] : memref<2x32xf32, #tpu.memory_space<vmem>>, vector<2x32xf32>
    %c0_6 = arith.constant 0 : index
    %c0_7 = arith.constant 0 : index
    %c0_8 = arith.constant 0 : index
    %6 = vector.load %arg1[%c0_6, %c0_7, %c0_8] : memref<8x2x128xf32, #tpu.memory_space<vmem>>, vector<1x2x128xf32>
    %7 = vector.shape_cast %6 : vector<1x2x128xf32> to vector<2x128xf32>
    %cst = arith.constant dense<0.000000e+00> : vector<2x128xf32>
    %8 = tpu.matmul %4, %3, %cst {dimension_numbers = #tpu.dot_dimension_numbers<[1], [0], [0], [1], [0, 0, 1, 1], [], []>} : vector<2x32xf32>, vector<32x128xf32>, vector<2x128xf32> -> vector<2x128xf32>
    %9 = arith.addf %7, %8 : vector<2x128xf32>
    %10 = vector.extract_strided_slice %9 {offsets = [0, 0], sizes = [2, 32], strides = [1, 1]} : vector<2x128xf32> to vector<2x32xf32>
    %11 = arith.negf %10 : vector<2x32xf32>
    %12 = math.exp %11 : vector<2x32xf32>
    %cst_9 = arith.constant 1.000000e+00 : f32
    %13 = vector.broadcast %cst_9 : f32 to vector<2x32xf32>
    %14 = arith.addf %13, %12 : vector<2x32xf32>
    %15 = arith.divf %13, %14 : vector<2x32xf32>
    %16 = vector.extract_strided_slice %9 {offsets = [0, 32], sizes = [2, 32], strides = [1, 1]} : vector<2x128xf32> to vector<2x32xf32>
    %17 = arith.negf %16 : vector<2x32xf32>
    %18 = math.exp %17 : vector<2x32xf32>
    %cst_10 = arith.constant 1.000000e+00 : f32
    %19 = vector.broadcast %cst_10 : f32 to vector<2x32xf32>
    %20 = arith.addf %19, %18 : vector<2x32xf32>
    %21 = arith.divf %19, %20 : vector<2x32xf32>
    %22 = vector.extract_strided_slice %9 {offsets = [0, 64], sizes = [2, 32], strides = [1, 1]} : vector<2x128xf32> to vector<2x32xf32>
    %23 = math.tanh %22 : vector<2x32xf32>
    %24 = vector.extract_strided_slice %9 {offsets = [0, 96], sizes = [2, 32], strides = [1, 1]} : vector<2x128xf32> to vector<2x32xf32>
    %25 = arith.negf %24 : vector<2x32xf32>
    %26 = math.exp %25 : vector<2x32xf32>
    %cst_11 = arith.constant 1.000000e+00 : f32
    %27 = vector.broadcast %cst_11 : f32 to vector<2x32xf32>
    %28 = arith.addf %27, %26 : vector<2x32xf32>
    %29 = arith.divf %27, %28 : vector<2x32xf32>
    %30 = arith.mulf %21, %5 : vector<2x32xf32>
    %31 = arith.mulf %15, %23 : vector<2x32xf32>
    %32 = arith.addf %30, %31 : vector<2x32xf32>
    %33 = math.tanh %32 : vector<2x32xf32>
    %34 = arith.mulf %29, %33 : vector<2x32xf32>
    %c0_12 = arith.constant 0 : index
    %c0_13 = arith.constant 0 : index
    %c0_14 = arith.constant 0 : index
    %35 = vector.load %arg3[%c0_12, %c0_13, %c0_14] : memref<8x2x32xf32, #tpu.memory_space<vmem>>, vector<1x2x32xf32>
    %36 = vector.shape_cast %35 : vector<1x2x32xf32> to vector<2x32xf32>
    %37 = vector.shape_cast %34 : vector<2x32xf32> to vector<1x2x32xf32>
    tpu.vector_store %arg3[%c0_12, %c0_13, %c0_14], %37 {strides = array<i32>} : memref<8x2x32xf32, #tpu.memory_space<vmem>>, vector<1x2x32xf32>,
    %c1 = arith.constant 1 : index
    %c0_15 = arith.constant 0 : index
    %c0_16 = arith.constant 0 : index
    %38 = vector.load %arg1[%c1, %c0_15, %c0_16] : memref<8x2x128xf32, #tpu.memory_space<vmem>>, vector<1x2x128xf32>
    %39 = vector.shape_cast %38 : vector<1x2x128xf32> to vector<2x128xf32>
    %cst_17 = arith.constant dense<0.000000e+00> : vector<2x128xf32>
    %40 = tpu.matmul %34, %3, %cst_17 {dimension_numbers = #tpu.dot_dimension_numbers<[1], [0], [0], [1], [0, 0, 1, 1], [], []>} : vector<2x32xf32>, vector<32x128xf32>, vector<2x128xf32> -> vector<2x128xf32>
    %41 = arith.addf %39, %40 : vector<2x128xf32>
    %42 = vector.extract_strided_slice %41 {offsets = [0, 0], sizes = [2, 32], strides = [1, 1]} : vector<2x128xf32> to vector<2x32xf32>
    %43 = arith.negf %42 : vector<2x32xf32>
    %44 = math.exp %43 : vector<2x32xf32>
    %cst_18 = arith.constant 1.000000e+00 : f32
    %45 = vector.broadcast %cst_18 : f32 to vector<2x32xf32>
    %46 = arith.addf %45, %44 : vector<2x32xf32>
    %47 = arith.divf %45, %46 : vector<2x32xf32>
    %48 = vector.extract_strided_slice %41 {offsets = [0, 32], sizes = [2, 32], strides = [1, 1]} : vector<2x128xf32> to vector<2x32xf32>
    %49 = arith.negf %48 : vector<2x32xf32>
    %50 = math.exp %49 : vector<2x32xf32>
    %cst_19 = arith.constant 1.000000e+00 : f32
    %51 = vector.broadcast %cst_19 : f32 to vector<2x32xf32>
    %52 = arith.addf %51, %50 : vector<2x32xf32>
    %53 = arith.divf %51, %52 : vector<2x32xf32>
    %54 = vector.extract_strided_slice %41 {offsets = [0, 64], sizes = [2, 32], strides = [1, 1]} : vector<2x128xf32> to vector<2x32xf32>
    %55 = math.tanh %54 : vector<2x32xf32>
    %56 = vector.extract_strided_slice %41 {offsets = [0, 96], sizes = [2, 32], strides = [1, 1]} : vector<2x128xf32> to vector<2x32xf32>
    %57 = arith.negf %56 : vector<2x32xf32>
    %58 = math.exp %57 : vector<2x32xf32>
    %cst_20 = arith.constant 1.000000e+00 : f32
    %59 = vector.broadcast %cst_20 : f32 to vector<2x32xf32>
    %60 = arith.addf %59, %58 : vector<2x32xf32>
    %61 = arith.divf %59, %60 : vector<2x32xf32>
    %62 = arith.mulf %53, %32 : vector<2x32xf32>
    %63 = arith.mulf %47, %55 : vector<2x32xf32>
    %64 = arith.addf %62, %63 : vector<2x32xf32>
    %65 = math.tanh %64 : vector<2x32xf32>
    %66 = arith.mulf %61, %65 : vector<2x32xf32>
    %c1_21 = arith.constant 1 : index
    %c0_22 = arith.constant 0 : index
    %c0_23 = arith.constant 0 : index
    %67 = vector.load %arg3[%c1_21, %c0_22, %c0_23] : memref<8x2x32xf32, #tpu.memory_space<vmem>>, vector<1x2x32xf32>
    %68 = vector.shape_cast %67 : vector<1x2x32xf32> to vector<2x32xf32>
    %69 = vector.shape_cast %66 : vector<2x32xf32> to vector<1x2x32xf32>
    tpu.vector_store %arg3[%c1_21, %c0_22, %c0_23], %69 {strides = array<i32>} : memref<8x2x32xf32, #tpu.memory_space<vmem>>, vector<1x2x32xf32>,
    %c2 = arith.constant 2 : index
    %c0_24 = arith.constant 0 : index
    %c0_25 = arith.constant 0 : index
    %70 = vector.load %arg1[%c2, %c0_24, %c0_25] : memref<8x2x128xf32, #tpu.memory_space<vmem>>, vector<1x2x128xf32>
    %71 = vector.shape_cast %70 : vector<1x2x128xf32> to vector<2x128xf32>
    %cst_26 = arith.constant dense<0.000000e+00> : vector<2x128xf32>
    %72 = tpu.matmul %66, %3, %cst_26 {dimension_numbers = #tpu.dot_dimension_numbers<[1], [0], [0], [1], [0, 0, 1, 1], [], []>} : vector<2x32xf32>, vector<32x128xf32>, vector<2x128xf32> -> vector<2x128xf32>
    %73 = arith.addf %71, %72 : vector<2x128xf32>
    %74 = vector.extract_strided_slice %73 {offsets = [0, 0], sizes = [2, 32], strides = [1, 1]} : vector<2x128xf32> to vector<2x32xf32>
    %75 = arith.negf %74 : vector<2x32xf32>
    %76 = math.exp %75 : vector<2x32xf32>
    %cst_27 = arith.constant 1.000000e+00 : f32
    %77 = vector.broadcast %cst_27 : f32 to vector<2x32xf32>
    %78 = arith.addf %77, %76 : vector<2x32xf32>
    %79 = arith.divf %77, %78 : vector<2x32xf32>
    %80 = vector.extract_strided_slice %73 {offsets = [0, 32], sizes = [2, 32], strides = [1, 1]} : vector<2x128xf32> to vector<2x32xf32>
    %81 = arith.negf %80 : vector<2x32xf32>
    %82 = math.exp %81 : vector<2x32xf32>
    %cst_28 = arith.constant 1.000000e+00 : f32
    %83 = vector.broadcast %cst_28 : f32 to vector<2x32xf32>
    %84 = arith.addf %83, %82 : vector<2x32xf32>
    %85 = arith.divf %83, %84 : vector<2x32xf32>
    %86 = vector.extract_strided_slice %73 {offsets = [0, 64], sizes = [2, 32], strides = [1, 1]} : vector<2x128xf32> to vector<2x32xf32>
    %87 = math.tanh %86 : vector<2x32xf32>
    %88 = vector.extract_strided_slice %73 {offsets = [0, 96], sizes = [2, 32], strides = [1, 1]} : vector<2x128xf32> to vector<2x32xf32>
    %89 = arith.negf %88 : vector<2x32xf32>
    %90 = math.exp %89 : vector<2x32xf32>
    %cst_29 = arith.constant 1.000000e+00 : f32
    %91 = vector.broadcast %cst_29 : f32 to vector<2x32xf32>
    %92 = arith.addf %91, %90 : vector<2x32xf32>
    %93 = arith.divf %91, %92 : vector<2x32xf32>
    %94 = arith.mulf %85, %64 : vector<2x32xf32>
    %95 = arith.mulf %79, %87 : vector<2x32xf32>
    %96 = arith.addf %94, %95 : vector<2x32xf32>
    %97 = math.tanh %96 : vector<2x32xf32>
    %98 = arith.mulf %93, %97 : vector<2x32xf32>
    %c2_30 = arith.constant 2 : index
    %c0_31 = arith.constant 0 : index
    %c0_32 = arith.constant 0 : index
    %99 = vector.load %arg3[%c2_30, %c0_31, %c0_32] : memref<8x2x32xf32, #tpu.memory_space<vmem>>, vector<1x2x32xf32>
    %100 = vector.shape_cast %99 : vector<1x2x32xf32> to vector<2x32xf32>
    %101 = vector.shape_cast %98 : vector<2x32xf32> to vector<1x2x32xf32>
    tpu.vector_store %arg3[%c2_30, %c0_31, %c0_32], %101 {strides = array<i32>} : memref<8x2x32xf32, #tpu.memory_space<vmem>>, vector<1x2x32xf32>,
    %c3 = arith.constant 3 : index
    %c0_33 = arith.constant 0 : index
    %c0_34 = arith.constant 0 : index
    %102 = vector.load %arg1[%c3, %c0_33, %c0_34] : memref<8x2x128xf32, #tpu.memory_space<vmem>>, vector<1x2x128xf32>
    %103 = vector.shape_cast %102 : vector<1x2x128xf32> to vector<2x128xf32>
    %cst_35 = arith.constant dense<0.000000e+00> : vector<2x128xf32>
    %104 = tpu.matmul %98, %3, %cst_35 {dimension_numbers = #tpu.dot_dimension_numbers<[1], [0], [0], [1], [0, 0, 1, 1], [], []>} : vector<2x32xf32>, vector<32x128xf32>, vector<2x128xf32> -> vector<2x128xf32>
    %105 = arith.addf %103, %104 : vector<2x128xf32>
    %106 = vector.extract_strided_slice %105 {offsets = [0, 0], sizes = [2, 32], strides = [1, 1]} : vector<2x128xf32> to vector<2x32xf32>
    %107 = arith.negf %106 : vector<2x32xf32>
    %108 = math.exp %107 : vector<2x32xf32>
    %cst_36 = arith.constant 1.000000e+00 : f32
    %109 = vector.broadcast %cst_36 : f32 to vector<2x32xf32>
    %110 = arith.addf %109, %108 : vector<2x32xf32>
    %111 = arith.divf %109, %110 : vector<2x32xf32>
    %112 = vector.extract_strided_slice %105 {offsets = [0, 32], sizes = [2, 32], strides = [1, 1]} : vector<2x128xf32> to vector<2x32xf32>
    %113 = arith.negf %112 : vector<2x32xf32>
    %114 = math.exp %113 : vector<2x32xf32>
    %cst_37 = arith.constant 1.000000e+00 : f32
    %115 = vector.broadcast %cst_37 : f32 to vector<2x32xf32>
    %116 = arith.addf %115, %114 : vector<2x32xf32>
    %117 = arith.divf %115, %116 : vector<2x32xf32>
    %118 = vector.extract_strided_slice %105 {offsets = [0, 64], sizes = [2, 32], strides = [1, 1]} : vector<2x128xf32> to vector<2x32xf32>
    %119 = math.tanh %118 : vector<2x32xf32>
    %120 = vector.extract_strided_slice %105 {offsets = [0, 96], sizes = [2, 32], strides = [1, 1]} : vector<2x128xf32> to vector<2x32xf32>
    %121 = arith.negf %120 : vector<2x32xf32>
    %122 = math.exp %121 : vector<2x32xf32>
    %cst_38 = arith.constant 1.000000e+00 : f32
    %123 = vector.broadcast %cst_38 : f32 to vector<2x32xf32>
    %124 = arith.addf %123, %122 : vector<2x32xf32>
    %125 = arith.divf %123, %124 : vector<2x32xf32>
    %126 = arith.mulf %117, %96 : vector<2x32xf32>
    %127 = arith.mulf %111, %119 : vector<2x32xf32>
    %128 = arith.addf %126, %127 : vector<2x32xf32>
    %129 = math.tanh %128 : vector<2x32xf32>
    %130 = arith.mulf %125, %129 : vector<2x32xf32>
    %c3_39 = arith.constant 3 : index
    %c0_40 = arith.constant 0 : index
    %c0_41 = arith.constant 0 : index
    %131 = vector.load %arg3[%c3_39, %c0_40, %c0_41] : memref<8x2x32xf32, #tpu.memory_space<vmem>>, vector<1x2x32xf32>
    %132 = vector.shape_cast %131 : vector<1x2x32xf32> to vector<2x32xf32>
    %133 = vector.shape_cast %130 : vector<2x32xf32> to vector<1x2x32xf32>
    tpu.vector_store %arg3[%c3_39, %c0_40, %c0_41], %133 {strides = array<i32>} : memref<8x2x32xf32, #tpu.memory_space<vmem>>, vector<1x2x32xf32>,
    %c4 = arith.constant 4 : index
    %c0_42 = arith.constant 0 : index
    %c0_43 = arith.constant 0 : index
    %134 = vector.load %arg1[%c4, %c0_42, %c0_43] : memref<8x2x128xf32, #tpu.memory_space<vmem>>, vector<1x2x128xf32>
    %135 = vector.shape_cast %134 : vector<1x2x128xf32> to vector<2x128xf32>
    %cst_44 = arith.constant dense<0.000000e+00> : vector<2x128xf32>
    %136 = tpu.matmul %130, %3, %cst_44 {dimension_numbers = #tpu.dot_dimension_numbers<[1], [0], [0], [1], [0, 0, 1, 1], [], []>} : vector<2x32xf32>, vector<32x128xf32>, vector<2x128xf32> -> vector<2x128xf32>
    %137 = arith.addf %135, %136 : vector<2x128xf32>
    %138 = vector.extract_strided_slice %137 {offsets = [0, 0], sizes = [2, 32], strides = [1, 1]} : vector<2x128xf32> to vector<2x32xf32>
    %139 = arith.negf %138 : vector<2x32xf32>
    %140 = math.exp %139 : vector<2x32xf32>
    %cst_45 = arith.constant 1.000000e+00 : f32
    %141 = vector.broadcast %cst_45 : f32 to vector<2x32xf32>
    %142 = arith.addf %141, %140 : vector<2x32xf32>
    %143 = arith.divf %141, %142 : vector<2x32xf32>
    %144 = vector.extract_strided_slice %137 {offsets = [0, 32], sizes = [2, 32], strides = [1, 1]} : vector<2x128xf32> to vector<2x32xf32>
    %145 = arith.negf %144 : vector<2x32xf32>
    %146 = math.exp %145 : vector<2x32xf32>
    %cst_46 = arith.constant 1.000000e+00 : f32
    %147 = vector.broadcast %cst_46 : f32 to vector<2x32xf32>
    %148 = arith.addf %147, %146 : vector<2x32xf32>
    %149 = arith.divf %147, %148 : vector<2x32xf32>
    %150 = vector.extract_strided_slice %137 {offsets = [0, 64], sizes = [2, 32], strides = [1, 1]} : vector<2x128xf32> to vector<2x32xf32>
    %151 = math.tanh %150 : vector<2x32xf32>
    %152 = vector.extract_strided_slice %137 {offsets = [0, 96], sizes = [2, 32], strides = [1, 1]} : vector<2x128xf32> to vector<2x32xf32>
    %153 = arith.negf %152 : vector<2x32xf32>
    %154 = math.exp %153 : vector<2x32xf32>
    %cst_47 = arith.constant 1.000000e+00 : f32
    %155 = vector.broadcast %cst_47 : f32 to vector<2x32xf32>
    %156 = arith.addf %155, %154 : vector<2x32xf32>
    %157 = arith.divf %155, %156 : vector<2x32xf32>
    %158 = arith.mulf %149, %128 : vector<2x32xf32>
    %159 = arith.mulf %143, %151 : vector<2x32xf32>
    %160 = arith.addf %158, %159 : vector<2x32xf32>
    %161 = math.tanh %160 : vector<2x32xf32>
    %162 = arith.mulf %157, %161 : vector<2x32xf32>
    %c4_48 = arith.constant 4 : index
    %c0_49 = arith.constant 0 : index
    %c0_50 = arith.constant 0 : index
    %163 = vector.load %arg3[%c4_48, %c0_49, %c0_50] : memref<8x2x32xf32, #tpu.memory_space<vmem>>, vector<1x2x32xf32>
    %164 = vector.shape_cast %163 : vector<1x2x32xf32> to vector<2x32xf32>
    %165 = vector.shape_cast %162 : vector<2x32xf32> to vector<1x2x32xf32>
    tpu.vector_store %arg3[%c4_48, %c0_49, %c0_50], %165 {strides = array<i32>} : memref<8x2x32xf32, #tpu.memory_space<vmem>>, vector<1x2x32xf32>,
    %c5 = arith.constant 5 : index
    %c0_51 = arith.constant 0 : index
    %c0_52 = arith.constant 0 : index
    %166 = vector.load %arg1[%c5, %c0_51, %c0_52] : memref<8x2x128xf32, #tpu.memory_space<vmem>>, vector<1x2x128xf32>
    %167 = vector.shape_cast %166 : vector<1x2x128xf32> to vector<2x128xf32>
    %cst_53 = arith.constant dense<0.000000e+00> : vector<2x128xf32>
    %168 = tpu.matmul %162, %3, %cst_53 {dimension_numbers = #tpu.dot_dimension_numbers<[1], [0], [0], [1], [0, 0, 1, 1], [], []>} : vector<2x32xf32>, vector<32x128xf32>, vector<2x128xf32> -> vector<2x128xf32>
    %169 = arith.addf %167, %168 : vector<2x128xf32>
    %170 = vector.extract_strided_slice %169 {offsets = [0, 0], sizes = [2, 32], strides = [1, 1]} : vector<2x128xf32> to vector<2x32xf32>
    %171 = arith.negf %170 : vector<2x32xf32>
    %172 = math.exp %171 : vector<2x32xf32>
    %cst_54 = arith.constant 1.000000e+00 : f32
    %173 = vector.broadcast %cst_54 : f32 to vector<2x32xf32>
    %174 = arith.addf %173, %172 : vector<2x32xf32>
    %175 = arith.divf %173, %174 : vector<2x32xf32>
    %176 = vector.extract_strided_slice %169 {offsets = [0, 32], sizes = [2, 32], strides = [1, 1]} : vector<2x128xf32> to vector<2x32xf32>
    %177 = arith.negf %176 : vector<2x32xf32>
    %178 = math.exp %177 : vector<2x32xf32>
    %cst_55 = arith.constant 1.000000e+00 : f32
    %179 = vector.broadcast %cst_55 : f32 to vector<2x32xf32>
    %180 = arith.addf %179, %178 : vector<2x32xf32>
    %181 = arith.divf %179, %180 : vector<2x32xf32>
    %182 = vector.extract_strided_slice %169 {offsets = [0, 64], sizes = [2, 32], strides = [1, 1]} : vector<2x128xf32> to vector<2x32xf32>
    %183 = math.tanh %182 : vector<2x32xf32>
    %184 = vector.extract_strided_slice %169 {offsets = [0, 96], sizes = [2, 32], strides = [1, 1]} : vector<2x128xf32> to vector<2x32xf32>
    %185 = arith.negf %184 : vector<2x32xf32>
    %186 = math.exp %185 : vector<2x32xf32>
    %cst_56 = arith.constant 1.000000e+00 : f32
    %187 = vector.broadcast %cst_56 : f32 to vector<2x32xf32>
    %188 = arith.addf %187, %186 : vector<2x32xf32>
    %189 = arith.divf %187, %188 : vector<2x32xf32>
    %190 = arith.mulf %181, %160 : vector<2x32xf32>
    %191 = arith.mulf %175, %183 : vector<2x32xf32>
    %192 = arith.addf %190, %191 : vector<2x32xf32>
    %193 = math.tanh %192 : vector<2x32xf32>
    %194 = arith.mulf %189, %193 : vector<2x32xf32>
    %c5_57 = arith.constant 5 : index
    %c0_58 = arith.constant 0 : index
    %c0_59 = arith.constant 0 : index
    %195 = vector.load %arg3[%c5_57, %c0_58, %c0_59] : memref<8x2x32xf32, #tpu.memory_space<vmem>>, vector<1x2x32xf32>
    %196 = vector.shape_cast %195 : vector<1x2x32xf32> to vector<2x32xf32>
    %197 = vector.shape_cast %194 : vector<2x32xf32> to vector<1x2x32xf32>
    tpu.vector_store %arg3[%c5_57, %c0_58, %c0_59], %197 {strides = array<i32>} : memref<8x2x32xf32, #tpu.memory_space<vmem>>, vector<1x2x32xf32>,
    %c6 = arith.constant 6 : index
    %c0_60 = arith.constant 0 : index
    %c0_61 = arith.constant 0 : index
    %198 = vector.load %arg1[%c6, %c0_60, %c0_61] : memref<8x2x128xf32, #tpu.memory_space<vmem>>, vector<1x2x128xf32>
    %199 = vector.shape_cast %198 : vector<1x2x128xf32> to vector<2x128xf32>
    %cst_62 = arith.constant dense<0.000000e+00> : vector<2x128xf32>
    %200 = tpu.matmul %194, %3, %cst_62 {dimension_numbers = #tpu.dot_dimension_numbers<[1], [0], [0], [1], [0, 0, 1, 1], [], []>} : vector<2x32xf32>, vector<32x128xf32>, vector<2x128xf32> -> vector<2x128xf32>
    %201 = arith.addf %199, %200 : vector<2x128xf32>
    %202 = vector.extract_strided_slice %201 {offsets = [0, 0], sizes = [2, 32], strides = [1, 1]} : vector<2x128xf32> to vector<2x32xf32>
    %203 = arith.negf %202 : vector<2x32xf32>
    %204 = math.exp %203 : vector<2x32xf32>
    %cst_63 = arith.constant 1.000000e+00 : f32
    %205 = vector.broadcast %cst_63 : f32 to vector<2x32xf32>
    %206 = arith.addf %205, %204 : vector<2x32xf32>
    %207 = arith.divf %205, %206 : vector<2x32xf32>
    %208 = vector.extract_strided_slice %201 {offsets = [0, 32], sizes = [2, 32], strides = [1, 1]} : vector<2x128xf32> to vector<2x32xf32>
    %209 = arith.negf %208 : vector<2x32xf32>
    %210 = math.exp %209 : vector<2x32xf32>
    %cst_64 = arith.constant 1.000000e+00 : f32
    %211 = vector.broadcast %cst_64 : f32 to vector<2x32xf32>
    %212 = arith.addf %211, %210 : vector<2x32xf32>
    %213 = arith.divf %211, %212 : vector<2x32xf32>
    %214 = vector.extract_strided_slice %201 {offsets = [0, 64], sizes = [2, 32], strides = [1, 1]} : vector<2x128xf32> to vector<2x32xf32>
    %215 = math.tanh %214 : vector<2x32xf32>
    %216 = vector.extract_strided_slice %201 {offsets = [0, 96], sizes = [2, 32], strides = [1, 1]} : vector<2x128xf32> to vector<2x32xf32>
    %217 = arith.negf %216 : vector<2x32xf32>
    %218 = math.exp %217 : vector<2x32xf32>
    %cst_65 = arith.constant 1.000000e+00 : f32
    %219 = vector.broadcast %cst_65 : f32 to vector<2x32xf32>
    %220 = arith.addf %219, %218 : vector<2x32xf32>
    %221 = arith.divf %219, %220 : vector<2x32xf32>
    %222 = arith.mulf %213, %192 : vector<2x32xf32>
    %223 = arith.mulf %207, %215 : vector<2x32xf32>
    %224 = arith.addf %222, %223 : vector<2x32xf32>
    %225 = math.tanh %224 : vector<2x32xf32>
    %226 = arith.mulf %221, %225 : vector<2x32xf32>
    %c6_66 = arith.constant 6 : index
    %c0_67 = arith.constant 0 : index
    %c0_68 = arith.constant 0 : index
    %227 = vector.load %arg3[%c6_66, %c0_67, %c0_68] : memref<8x2x32xf32, #tpu.memory_space<vmem>>, vector<1x2x32xf32>
    %228 = vector.shape_cast %227 : vector<1x2x32xf32> to vector<2x32xf32>
    %229 = vector.shape_cast %226 : vector<2x32xf32> to vector<1x2x32xf32>
    tpu.vector_store %arg3[%c6_66, %c0_67, %c0_68], %229 {strides = array<i32>} : memref<8x2x32xf32, #tpu.memory_space<vmem>>, vector<1x2x32xf32>,
    %c7 = arith.constant 7 : index
    %c0_69 = arith.constant 0 : index
    %c0_70 = arith.constant 0 : index
    %230 = vector.load %arg1[%c7, %c0_69, %c0_70] : memref<8x2x128xf32, #tpu.memory_space<vmem>>, vector<1x2x128xf32>
    %231 = vector.shape_cast %230 : vector<1x2x128xf32> to vector<2x128xf32>
    %cst_71 = arith.constant dense<0.000000e+00> : vector<2x128xf32>
    %232 = tpu.matmul %226, %3, %cst_71 {dimension_numbers = #tpu.dot_dimension_numbers<[1], [0], [0], [1], [0, 0, 1, 1], [], []>} : vector<2x32xf32>, vector<32x128xf32>, vector<2x128xf32> -> vector<2x128xf32>
    %233 = arith.addf %231, %232 : vector<2x128xf32>
    %234 = vector.extract_strided_slice %233 {offsets = [0, 0], sizes = [2, 32], strides = [1, 1]} : vector<2x128xf32> to vector<2x32xf32>
    %235 = arith.negf %234 : vector<2x32xf32>
    %236 = math.exp %235 : vector<2x32xf32>
    %cst_72 = arith.constant 1.000000e+00 : f32
    %237 = vector.broadcast %cst_72 : f32 to vector<2x32xf32>
    %238 = arith.addf %237, %236 : vector<2x32xf32>
    %239 = arith.divf %237, %238 : vector<2x32xf32>
    %240 = vector.extract_strided_slice %233 {offsets = [0, 32], sizes = [2, 32], strides = [1, 1]} : vector<2x128xf32> to vector<2x32xf32>
    %241 = arith.negf %240 : vector<2x32xf32>
    %242 = math.exp %241 : vector<2x32xf32>
    %cst_73 = arith.constant 1.000000e+00 : f32
    %243 = vector.broadcast %cst_73 : f32 to vector<2x32xf32>
    %244 = arith.addf %243, %242 : vector<2x32xf32>
    %245 = arith.divf %243, %244 : vector<2x32xf32>
    %246 = vector.extract_strided_slice %233 {offsets = [0, 64], sizes = [2, 32], strides = [1, 1]} : vector<2x128xf32> to vector<2x32xf32>
    %247 = math.tanh %246 : vector<2x32xf32>
    %248 = vector.extract_strided_slice %233 {offsets = [0, 96], sizes = [2, 32], strides = [1, 1]} : vector<2x128xf32> to vector<2x32xf32>
    %249 = arith.negf %248 : vector<2x32xf32>
    %250 = math.exp %249 : vector<2x32xf32>
    %cst_74 = arith.constant 1.000000e+00 : f32
    %251 = vector.broadcast %cst_74 : f32 to vector<2x32xf32>
    %252 = arith.addf %251, %250 : vector<2x32xf32>
    %253 = arith.divf %251, %252 : vector<2x32xf32>
    %254 = arith.mulf %245, %224 : vector<2x32xf32>
    %255 = arith.mulf %239, %247 : vector<2x32xf32>
    %256 = arith.addf %254, %255 : vector<2x32xf32>
    %257 = math.tanh %256 : vector<2x32xf32>
    %258 = arith.mulf %253, %257 : vector<2x32xf32>
    %c7_75 = arith.constant 7 : index
    %c0_76 = arith.constant 0 : index
    %c0_77 = arith.constant 0 : index
    %259 = vector.load %arg3[%c7_75, %c0_76, %c0_77] : memref<8x2x32xf32, #tpu.memory_space<vmem>>, vector<1x2x32xf32>
    %260 = vector.shape_cast %259 : vector<1x2x32xf32> to vector<2x32xf32>
    %261 = vector.shape_cast %258 : vector<2x32xf32> to vector<1x2x32xf32>
    tpu.vector_store %arg3[%c7_75, %c0_76, %c0_77], %261 {strides = array<i32>} : memref<8x2x32xf32, #tpu.memory_space<vmem>>, vector<1x2x32xf32>,
    %c0_78 = arith.constant 0 : index
    %c0_79 = arith.constant 0 : index
    %262 = vector.load %arg5[%c0_78, %c0_79] : memref<2x32xf32, #tpu.memory_space<vmem>>, vector<2x32xf32>
    tpu.vector_store %arg5[%c0_78, %c0_79], %258 {strides = array<i32>} : memref<2x32xf32, #tpu.memory_space<vmem>>, vector<2x32xf32>,
    %c0_80 = arith.constant 0 : index
    %c0_81 = arith.constant 0 : index
    %263 = vector.load %arg6[%c0_80, %c0_81] : memref<2x32xf32, #tpu.memory_space<vmem>>, vector<2x32xf32>
    tpu.vector_store %arg6[%c0_80, %c0_81], %256 {strides = array<i32>} : memref<2x32xf32, #tpu.memory_space<vmem>>, vector<2x32xf32>,
    return
  }
  func.func @transform_0(%arg0: i32) -> (i32, i32, i32) {
    %c0_i32 = arith.constant 0 : i32
    %c0_i32_0 = arith.constant 0 : i32
    %c0_i32_1 = arith.constant 0 : i32
    return %arg0, %c0_i32, %c0_i32_0 : i32, i32, i32
  }
  func.func @transform_2(%arg0: i32) -> (i32, i32, i32) {
    %c0_i32 = arith.constant 0 : i32
    %c0_i32_0 = arith.constant 0 : i32
    %c0_i32_1 = arith.constant 0 : i32
    return %arg0, %c0_i32, %c0_i32_0 : i32, i32, i32
  }
}

module attributes {stable_mosaic.version = 11 : i64} {
  func.func @_proj_kernel(%arg0: i32, %arg1: memref<16x4xf32, #tpu.memory_space<vmem>>, %arg2: memref<4x128xf32, #tpu.memory_space<vmem>>, %arg3: memref<1x128xf32, #tpu.memory_space<vmem>>, %arg4: memref<16x128xf32, #tpu.memory_space<vmem>>) attributes {dimension_semantics = [#tpu.dimension_semantics<parallel>], iteration_bounds = array<i64: 1>, scalar_prefetch = 0 : i64, scratch_operands = 0 : i64, tpu.core_type = #tpu.core_type<tc>, window_params = [{transform_indices = @transform_0, window_bounds = array<i64: 16, 4>}, {pipeline_mode = #tpu.pipeline_mode<synchronous>, transform_indices = @transform_1, window_bounds = array<i64: 4, 128>}, {pipeline_mode = #tpu.pipeline_mode<synchronous>, transform_indices = @transform_2, window_bounds = array<i64: 1, 128>}, {transform_indices = @transform_3, window_bounds = array<i64: 16, 128>}]} {
    %c0 = arith.constant 0 : index
    %c0_0 = arith.constant 0 : index
    %0 = vector.load %arg1[%c0, %c0_0] : memref<16x4xf32, #tpu.memory_space<vmem>>, vector<16x4xf32>
    %c0_1 = arith.constant 0 : index
    %c0_2 = arith.constant 0 : index
    %1 = vector.load %arg2[%c0_1, %c0_2] : memref<4x128xf32, #tpu.memory_space<vmem>>, vector<4x128xf32>
    %cst = arith.constant dense<0.000000e+00> : vector<16x128xf32>
    %2 = tpu.matmul %0, %1, %cst {dimension_numbers = #tpu.dot_dimension_numbers<[1], [0], [0], [1], [0, 0, 1, 1], [], []>} : vector<16x4xf32>, vector<4x128xf32>, vector<16x128xf32> -> vector<16x128xf32>
    %c0_3 = arith.constant 0 : index
    %c0_4 = arith.constant 0 : index
    %3 = vector.load %arg3[%c0_3, %c0_4] : memref<1x128xf32, #tpu.memory_space<vmem>>, vector<1x128xf32>
    %4 = vector.broadcast %3 : vector<1x128xf32> to vector<16x128xf32>
    %5 = arith.addf %2, %4 : vector<16x128xf32>
    %c0_5 = arith.constant 0 : index
    %c0_6 = arith.constant 0 : index
    %6 = vector.load %arg4[%c0_5, %c0_6] : memref<16x128xf32, #tpu.memory_space<vmem>>, vector<16x128xf32>
    tpu.vector_store %arg4[%c0_5, %c0_6], %5 {strides = array<i32>} : memref<16x128xf32, #tpu.memory_space<vmem>>, vector<16x128xf32>,
    return
  }
  func.func @transform_0(%arg0: i32) -> (i32, i32) {
    %c0_i32 = arith.constant 0 : i32
    %c0_i32_0 = arith.constant 0 : i32
    return %arg0, %c0_i32 : i32, i32
  }
  func.func @transform_1(%arg0: i32) -> (i32, i32) {
    %c0_i32 = arith.constant 0 : i32
    %c0_i32_0 = arith.constant 0 : i32
    %c0_i32_1 = arith.constant 0 : i32
    return %c0_i32, %c0_i32_0 : i32, i32
  }
  func.func @transform_2(%arg0: i32) -> (i32, i32) {
    %c0_i32 = arith.constant 0 : i32
    %c0_i32_0 = arith.constant 0 : i32
    %c0_i32_1 = arith.constant 0 : i32
    return %c0_i32, %c0_i32_0 : i32, i32
  }
  func.func @transform_3(%arg0: i32) -> (i32, i32) {
    %c0_i32 = arith.constant 0 : i32
    %c0_i32_0 = arith.constant 0 : i32
    return %arg0, %c0_i32 : i32, i32
  }
}

module attributes {stable_mosaic.version = 11 : i64} {
  func.func @_lstm_recurrent_kernel(%arg0: i32, %arg1: memref<8x2x128xf32, #tpu.memory_space<vmem>>, %arg2: memref<32x128xf32, #tpu.memory_space<any>>, %arg3: memref<32x3xf32, #tpu.memory_space<vmem>>, %arg4: memref<1x3xf32, #tpu.memory_space<vmem>>, %arg5: memref<2x3xf32, #tpu.memory_space<vmem>>, %arg6: memref<32x128xf32, #tpu.memory_space<vmem>>, %arg7: memref<2x32xf32, #tpu.memory_space<vmem>>, %arg8: memref<2x32xf32, #tpu.memory_space<vmem>>, %arg9: memref<1x!tpu.dma_semaphore, #tpu.memory_space<semaphore_mem>>) attributes {dimension_semantics = [#tpu.dimension_semantics<arbitrary>], iteration_bounds = array<i64: 1>, scalar_prefetch = 0 : i64, scratch_operands = 4 : i64, tpu.core_type = #tpu.core_type<tc>, window_params = [{transform_indices = @transform_0, window_bounds = array<i64: 8, 2, 128>}, {}, {pipeline_mode = #tpu.pipeline_mode<synchronous>, transform_indices = @transform_2, window_bounds = array<i64: 32, 3>}, {pipeline_mode = #tpu.pipeline_mode<synchronous>, transform_indices = @transform_3, window_bounds = array<i64: 1, 3>}, {pipeline_mode = #tpu.pipeline_mode<synchronous>, transform_indices = @transform_4, window_bounds = array<i64: 2, 3>}]} {
    %c0_i32 = arith.constant 0 : i32
    %0 = arith.cmpi eq, %arg0, %c0_i32 : i32
    %1 = arith.extui %0 : i1 to i32
    %c0_i32_0 = arith.constant 0 : i32
    %2 = arith.cmpi ne, %1, %c0_i32_0 : i32
    scf.if %2 {
      %cst_60 = arith.constant 0.000000e+00 : f32
      %243 = vector.broadcast %cst_60 : f32 to vector<2x32xf32>
      %c0_61 = arith.constant 0 : index
      %c0_62 = arith.constant 0 : index
      %244 = vector.load %arg7[%c0_61, %c0_62] : memref<2x32xf32, #tpu.memory_space<vmem>>, vector<2x32xf32>
      tpu.vector_store %arg7[%c0_61, %c0_62], %243 {strides = array<i32>} : memref<2x32xf32, #tpu.memory_space<vmem>>, vector<2x32xf32>,
      %cst_63 = arith.constant 0.000000e+00 : f32
      %245 = vector.broadcast %cst_63 : f32 to vector<2x32xf32>
      %c0_64 = arith.constant 0 : index
      %c0_65 = arith.constant 0 : index
      %246 = vector.load %arg8[%c0_64, %c0_65] : memref<2x32xf32, #tpu.memory_space<vmem>>, vector<2x32xf32>
      tpu.vector_store %arg8[%c0_64, %c0_65], %245 {strides = array<i32>} : memref<2x32xf32, #tpu.memory_space<vmem>>, vector<2x32xf32>,
      %c0_i32_66 = arith.constant 0 : i32
      %247 = tpu.memref_slice %arg9[%c0_i32_66] : memref<1x!tpu.dma_semaphore, #tpu.memory_space<semaphore_mem>> -> memref<1x!tpu.dma_semaphore, #tpu.memory_space<semaphore_mem>>
      %248 = tpu.memref_squeeze %247 : memref<1x!tpu.dma_semaphore, #tpu.memory_space<semaphore_mem>> -> memref<!tpu.dma_semaphore, #tpu.memory_space<semaphore_mem>>
      tpu.enqueue_dma source(%arg2 : memref<32x128xf32, #tpu.memory_space<any>>) target(%arg6 : memref<32x128xf32, #tpu.memory_space<vmem>>) target_semaphore(%248 : memref<!tpu.dma_semaphore, #tpu.memory_space<semaphore_mem>>)
      %c0_i32_67 = arith.constant 0 : i32
      %249 = tpu.memref_slice %arg9[%c0_i32_67] : memref<1x!tpu.dma_semaphore, #tpu.memory_space<semaphore_mem>> -> memref<1x!tpu.dma_semaphore, #tpu.memory_space<semaphore_mem>>
      %250 = tpu.memref_squeeze %249 : memref<1x!tpu.dma_semaphore, #tpu.memory_space<semaphore_mem>> -> memref<!tpu.dma_semaphore, #tpu.memory_space<semaphore_mem>>
      tpu.wait_dma2 semaphore(%250 : memref<!tpu.dma_semaphore, #tpu.memory_space<semaphore_mem>>) src(%arg2 : memref<32x128xf32, #tpu.memory_space<any>>) dst(%arg6 : memref<32x128xf32, #tpu.memory_space<vmem>>)
    } else {
    }
    %c0 = arith.constant 0 : index
    %c0_1 = arith.constant 0 : index
    %3 = vector.load %arg6[%c0, %c0_1] : memref<32x128xf32, #tpu.memory_space<vmem>>, vector<32x128xf32>
    %c0_2 = arith.constant 0 : index
    %c0_3 = arith.constant 0 : index
    %4 = vector.load %arg7[%c0_2, %c0_3] : memref<2x32xf32, #tpu.memory_space<vmem>>, vector<2x32xf32>
    %c0_4 = arith.constant 0 : index
    %c0_5 = arith.constant 0 : index
    %5 = vector.load %arg8[%c0_4, %c0_5] : memref<2x32xf32, #tpu.memory_space<vmem>>, vector<2x32xf32>
    %c0_6 = arith.constant 0 : index
    %c0_7 = arith.constant 0 : index
    %c0_8 = arith.constant 0 : index
    %6 = vector.load %arg1[%c0_6, %c0_7, %c0_8] : memref<8x2x128xf32, #tpu.memory_space<vmem>>, vector<1x2x128xf32>
    %7 = vector.shape_cast %6 : vector<1x2x128xf32> to vector<2x128xf32>
    %cst = arith.constant dense<0.000000e+00> : vector<2x128xf32>
    %8 = tpu.matmul %4, %3, %cst {dimension_numbers = #tpu.dot_dimension_numbers<[1], [0], [0], [1], [0, 0, 1, 1], [], []>} : vector<2x32xf32>, vector<32x128xf32>, vector<2x128xf32> -> vector<2x128xf32>
    %9 = arith.addf %7, %8 : vector<2x128xf32>
    %10 = vector.extract_strided_slice %9 {offsets = [0, 0], sizes = [2, 32], strides = [1, 1]} : vector<2x128xf32> to vector<2x32xf32>
    %11 = arith.negf %10 : vector<2x32xf32>
    %12 = math.exp %11 : vector<2x32xf32>
    %cst_9 = arith.constant 1.000000e+00 : f32
    %13 = vector.broadcast %cst_9 : f32 to vector<2x32xf32>
    %14 = arith.addf %13, %12 : vector<2x32xf32>
    %15 = arith.divf %13, %14 : vector<2x32xf32>
    %16 = vector.extract_strided_slice %9 {offsets = [0, 32], sizes = [2, 32], strides = [1, 1]} : vector<2x128xf32> to vector<2x32xf32>
    %17 = arith.negf %16 : vector<2x32xf32>
    %18 = math.exp %17 : vector<2x32xf32>
    %cst_10 = arith.constant 1.000000e+00 : f32
    %19 = vector.broadcast %cst_10 : f32 to vector<2x32xf32>
    %20 = arith.addf %19, %18 : vector<2x32xf32>
    %21 = arith.divf %19, %20 : vector<2x32xf32>
    %22 = vector.extract_strided_slice %9 {offsets = [0, 64], sizes = [2, 32], strides = [1, 1]} : vector<2x128xf32> to vector<2x32xf32>
    %23 = math.tanh %22 : vector<2x32xf32>
    %24 = vector.extract_strided_slice %9 {offsets = [0, 96], sizes = [2, 32], strides = [1, 1]} : vector<2x128xf32> to vector<2x32xf32>
    %25 = arith.negf %24 : vector<2x32xf32>
    %26 = math.exp %25 : vector<2x32xf32>
    %cst_11 = arith.constant 1.000000e+00 : f32
    %27 = vector.broadcast %cst_11 : f32 to vector<2x32xf32>
    %28 = arith.addf %27, %26 : vector<2x32xf32>
    %29 = arith.divf %27, %28 : vector<2x32xf32>
    %30 = arith.mulf %21, %5 : vector<2x32xf32>
    %31 = arith.mulf %15, %23 : vector<2x32xf32>
    %32 = arith.addf %30, %31 : vector<2x32xf32>
    %33 = math.tanh %32 : vector<2x32xf32>
    %34 = arith.mulf %29, %33 : vector<2x32xf32>
    %c1 = arith.constant 1 : index
    %c0_12 = arith.constant 0 : index
    %c0_13 = arith.constant 0 : index
    %35 = vector.load %arg1[%c1, %c0_12, %c0_13] : memref<8x2x128xf32, #tpu.memory_space<vmem>>, vector<1x2x128xf32>
    %36 = vector.shape_cast %35 : vector<1x2x128xf32> to vector<2x128xf32>
    %cst_14 = arith.constant dense<0.000000e+00> : vector<2x128xf32>
    %37 = tpu.matmul %34, %3, %cst_14 {dimension_numbers = #tpu.dot_dimension_numbers<[1], [0], [0], [1], [0, 0, 1, 1], [], []>} : vector<2x32xf32>, vector<32x128xf32>, vector<2x128xf32> -> vector<2x128xf32>
    %38 = arith.addf %36, %37 : vector<2x128xf32>
    %39 = vector.extract_strided_slice %38 {offsets = [0, 0], sizes = [2, 32], strides = [1, 1]} : vector<2x128xf32> to vector<2x32xf32>
    %40 = arith.negf %39 : vector<2x32xf32>
    %41 = math.exp %40 : vector<2x32xf32>
    %cst_15 = arith.constant 1.000000e+00 : f32
    %42 = vector.broadcast %cst_15 : f32 to vector<2x32xf32>
    %43 = arith.addf %42, %41 : vector<2x32xf32>
    %44 = arith.divf %42, %43 : vector<2x32xf32>
    %45 = vector.extract_strided_slice %38 {offsets = [0, 32], sizes = [2, 32], strides = [1, 1]} : vector<2x128xf32> to vector<2x32xf32>
    %46 = arith.negf %45 : vector<2x32xf32>
    %47 = math.exp %46 : vector<2x32xf32>
    %cst_16 = arith.constant 1.000000e+00 : f32
    %48 = vector.broadcast %cst_16 : f32 to vector<2x32xf32>
    %49 = arith.addf %48, %47 : vector<2x32xf32>
    %50 = arith.divf %48, %49 : vector<2x32xf32>
    %51 = vector.extract_strided_slice %38 {offsets = [0, 64], sizes = [2, 32], strides = [1, 1]} : vector<2x128xf32> to vector<2x32xf32>
    %52 = math.tanh %51 : vector<2x32xf32>
    %53 = vector.extract_strided_slice %38 {offsets = [0, 96], sizes = [2, 32], strides = [1, 1]} : vector<2x128xf32> to vector<2x32xf32>
    %54 = arith.negf %53 : vector<2x32xf32>
    %55 = math.exp %54 : vector<2x32xf32>
    %cst_17 = arith.constant 1.000000e+00 : f32
    %56 = vector.broadcast %cst_17 : f32 to vector<2x32xf32>
    %57 = arith.addf %56, %55 : vector<2x32xf32>
    %58 = arith.divf %56, %57 : vector<2x32xf32>
    %59 = arith.mulf %50, %32 : vector<2x32xf32>
    %60 = arith.mulf %44, %52 : vector<2x32xf32>
    %61 = arith.addf %59, %60 : vector<2x32xf32>
    %62 = math.tanh %61 : vector<2x32xf32>
    %63 = arith.mulf %58, %62 : vector<2x32xf32>
    %c2 = arith.constant 2 : index
    %c0_18 = arith.constant 0 : index
    %c0_19 = arith.constant 0 : index
    %64 = vector.load %arg1[%c2, %c0_18, %c0_19] : memref<8x2x128xf32, #tpu.memory_space<vmem>>, vector<1x2x128xf32>
    %65 = vector.shape_cast %64 : vector<1x2x128xf32> to vector<2x128xf32>
    %cst_20 = arith.constant dense<0.000000e+00> : vector<2x128xf32>
    %66 = tpu.matmul %63, %3, %cst_20 {dimension_numbers = #tpu.dot_dimension_numbers<[1], [0], [0], [1], [0, 0, 1, 1], [], []>} : vector<2x32xf32>, vector<32x128xf32>, vector<2x128xf32> -> vector<2x128xf32>
    %67 = arith.addf %65, %66 : vector<2x128xf32>
    %68 = vector.extract_strided_slice %67 {offsets = [0, 0], sizes = [2, 32], strides = [1, 1]} : vector<2x128xf32> to vector<2x32xf32>
    %69 = arith.negf %68 : vector<2x32xf32>
    %70 = math.exp %69 : vector<2x32xf32>
    %cst_21 = arith.constant 1.000000e+00 : f32
    %71 = vector.broadcast %cst_21 : f32 to vector<2x32xf32>
    %72 = arith.addf %71, %70 : vector<2x32xf32>
    %73 = arith.divf %71, %72 : vector<2x32xf32>
    %74 = vector.extract_strided_slice %67 {offsets = [0, 32], sizes = [2, 32], strides = [1, 1]} : vector<2x128xf32> to vector<2x32xf32>
    %75 = arith.negf %74 : vector<2x32xf32>
    %76 = math.exp %75 : vector<2x32xf32>
    %cst_22 = arith.constant 1.000000e+00 : f32
    %77 = vector.broadcast %cst_22 : f32 to vector<2x32xf32>
    %78 = arith.addf %77, %76 : vector<2x32xf32>
    %79 = arith.divf %77, %78 : vector<2x32xf32>
    %80 = vector.extract_strided_slice %67 {offsets = [0, 64], sizes = [2, 32], strides = [1, 1]} : vector<2x128xf32> to vector<2x32xf32>
    %81 = math.tanh %80 : vector<2x32xf32>
    %82 = vector.extract_strided_slice %67 {offsets = [0, 96], sizes = [2, 32], strides = [1, 1]} : vector<2x128xf32> to vector<2x32xf32>
    %83 = arith.negf %82 : vector<2x32xf32>
    %84 = math.exp %83 : vector<2x32xf32>
    %cst_23 = arith.constant 1.000000e+00 : f32
    %85 = vector.broadcast %cst_23 : f32 to vector<2x32xf32>
    %86 = arith.addf %85, %84 : vector<2x32xf32>
    %87 = arith.divf %85, %86 : vector<2x32xf32>
    %88 = arith.mulf %79, %61 : vector<2x32xf32>
    %89 = arith.mulf %73, %81 : vector<2x32xf32>
    %90 = arith.addf %88, %89 : vector<2x32xf32>
    %91 = math.tanh %90 : vector<2x32xf32>
    %92 = arith.mulf %87, %91 : vector<2x32xf32>
    %c3 = arith.constant 3 : index
    %c0_24 = arith.constant 0 : index
    %c0_25 = arith.constant 0 : index
    %93 = vector.load %arg1[%c3, %c0_24, %c0_25] : memref<8x2x128xf32, #tpu.memory_space<vmem>>, vector<1x2x128xf32>
    %94 = vector.shape_cast %93 : vector<1x2x128xf32> to vector<2x128xf32>
    %cst_26 = arith.constant dense<0.000000e+00> : vector<2x128xf32>
    %95 = tpu.matmul %92, %3, %cst_26 {dimension_numbers = #tpu.dot_dimension_numbers<[1], [0], [0], [1], [0, 0, 1, 1], [], []>} : vector<2x32xf32>, vector<32x128xf32>, vector<2x128xf32> -> vector<2x128xf32>
    %96 = arith.addf %94, %95 : vector<2x128xf32>
    %97 = vector.extract_strided_slice %96 {offsets = [0, 0], sizes = [2, 32], strides = [1, 1]} : vector<2x128xf32> to vector<2x32xf32>
    %98 = arith.negf %97 : vector<2x32xf32>
    %99 = math.exp %98 : vector<2x32xf32>
    %cst_27 = arith.constant 1.000000e+00 : f32
    %100 = vector.broadcast %cst_27 : f32 to vector<2x32xf32>
    %101 = arith.addf %100, %99 : vector<2x32xf32>
    %102 = arith.divf %100, %101 : vector<2x32xf32>
    %103 = vector.extract_strided_slice %96 {offsets = [0, 32], sizes = [2, 32], strides = [1, 1]} : vector<2x128xf32> to vector<2x32xf32>
    %104 = arith.negf %103 : vector<2x32xf32>
    %105 = math.exp %104 : vector<2x32xf32>
    %cst_28 = arith.constant 1.000000e+00 : f32
    %106 = vector.broadcast %cst_28 : f32 to vector<2x32xf32>
    %107 = arith.addf %106, %105 : vector<2x32xf32>
    %108 = arith.divf %106, %107 : vector<2x32xf32>
    %109 = vector.extract_strided_slice %96 {offsets = [0, 64], sizes = [2, 32], strides = [1, 1]} : vector<2x128xf32> to vector<2x32xf32>
    %110 = math.tanh %109 : vector<2x32xf32>
    %111 = vector.extract_strided_slice %96 {offsets = [0, 96], sizes = [2, 32], strides = [1, 1]} : vector<2x128xf32> to vector<2x32xf32>
    %112 = arith.negf %111 : vector<2x32xf32>
    %113 = math.exp %112 : vector<2x32xf32>
    %cst_29 = arith.constant 1.000000e+00 : f32
    %114 = vector.broadcast %cst_29 : f32 to vector<2x32xf32>
    %115 = arith.addf %114, %113 : vector<2x32xf32>
    %116 = arith.divf %114, %115 : vector<2x32xf32>
    %117 = arith.mulf %108, %90 : vector<2x32xf32>
    %118 = arith.mulf %102, %110 : vector<2x32xf32>
    %119 = arith.addf %117, %118 : vector<2x32xf32>
    %120 = math.tanh %119 : vector<2x32xf32>
    %121 = arith.mulf %116, %120 : vector<2x32xf32>
    %c4 = arith.constant 4 : index
    %c0_30 = arith.constant 0 : index
    %c0_31 = arith.constant 0 : index
    %122 = vector.load %arg1[%c4, %c0_30, %c0_31] : memref<8x2x128xf32, #tpu.memory_space<vmem>>, vector<1x2x128xf32>
    %123 = vector.shape_cast %122 : vector<1x2x128xf32> to vector<2x128xf32>
    %cst_32 = arith.constant dense<0.000000e+00> : vector<2x128xf32>
    %124 = tpu.matmul %121, %3, %cst_32 {dimension_numbers = #tpu.dot_dimension_numbers<[1], [0], [0], [1], [0, 0, 1, 1], [], []>} : vector<2x32xf32>, vector<32x128xf32>, vector<2x128xf32> -> vector<2x128xf32>
    %125 = arith.addf %123, %124 : vector<2x128xf32>
    %126 = vector.extract_strided_slice %125 {offsets = [0, 0], sizes = [2, 32], strides = [1, 1]} : vector<2x128xf32> to vector<2x32xf32>
    %127 = arith.negf %126 : vector<2x32xf32>
    %128 = math.exp %127 : vector<2x32xf32>
    %cst_33 = arith.constant 1.000000e+00 : f32
    %129 = vector.broadcast %cst_33 : f32 to vector<2x32xf32>
    %130 = arith.addf %129, %128 : vector<2x32xf32>
    %131 = arith.divf %129, %130 : vector<2x32xf32>
    %132 = vector.extract_strided_slice %125 {offsets = [0, 32], sizes = [2, 32], strides = [1, 1]} : vector<2x128xf32> to vector<2x32xf32>
    %133 = arith.negf %132 : vector<2x32xf32>
    %134 = math.exp %133 : vector<2x32xf32>
    %cst_34 = arith.constant 1.000000e+00 : f32
    %135 = vector.broadcast %cst_34 : f32 to vector<2x32xf32>
    %136 = arith.addf %135, %134 : vector<2x32xf32>
    %137 = arith.divf %135, %136 : vector<2x32xf32>
    %138 = vector.extract_strided_slice %125 {offsets = [0, 64], sizes = [2, 32], strides = [1, 1]} : vector<2x128xf32> to vector<2x32xf32>
    %139 = math.tanh %138 : vector<2x32xf32>
    %140 = vector.extract_strided_slice %125 {offsets = [0, 96], sizes = [2, 32], strides = [1, 1]} : vector<2x128xf32> to vector<2x32xf32>
    %141 = arith.negf %140 : vector<2x32xf32>
    %142 = math.exp %141 : vector<2x32xf32>
    %cst_35 = arith.constant 1.000000e+00 : f32
    %143 = vector.broadcast %cst_35 : f32 to vector<2x32xf32>
    %144 = arith.addf %143, %142 : vector<2x32xf32>
    %145 = arith.divf %143, %144 : vector<2x32xf32>
    %146 = arith.mulf %137, %119 : vector<2x32xf32>
    %147 = arith.mulf %131, %139 : vector<2x32xf32>
    %148 = arith.addf %146, %147 : vector<2x32xf32>
    %149 = math.tanh %148 : vector<2x32xf32>
    %150 = arith.mulf %145, %149 : vector<2x32xf32>
    %c5 = arith.constant 5 : index
    %c0_36 = arith.constant 0 : index
    %c0_37 = arith.constant 0 : index
    %151 = vector.load %arg1[%c5, %c0_36, %c0_37] : memref<8x2x128xf32, #tpu.memory_space<vmem>>, vector<1x2x128xf32>
    %152 = vector.shape_cast %151 : vector<1x2x128xf32> to vector<2x128xf32>
    %cst_38 = arith.constant dense<0.000000e+00> : vector<2x128xf32>
    %153 = tpu.matmul %150, %3, %cst_38 {dimension_numbers = #tpu.dot_dimension_numbers<[1], [0], [0], [1], [0, 0, 1, 1], [], []>} : vector<2x32xf32>, vector<32x128xf32>, vector<2x128xf32> -> vector<2x128xf32>
    %154 = arith.addf %152, %153 : vector<2x128xf32>
    %155 = vector.extract_strided_slice %154 {offsets = [0, 0], sizes = [2, 32], strides = [1, 1]} : vector<2x128xf32> to vector<2x32xf32>
    %156 = arith.negf %155 : vector<2x32xf32>
    %157 = math.exp %156 : vector<2x32xf32>
    %cst_39 = arith.constant 1.000000e+00 : f32
    %158 = vector.broadcast %cst_39 : f32 to vector<2x32xf32>
    %159 = arith.addf %158, %157 : vector<2x32xf32>
    %160 = arith.divf %158, %159 : vector<2x32xf32>
    %161 = vector.extract_strided_slice %154 {offsets = [0, 32], sizes = [2, 32], strides = [1, 1]} : vector<2x128xf32> to vector<2x32xf32>
    %162 = arith.negf %161 : vector<2x32xf32>
    %163 = math.exp %162 : vector<2x32xf32>
    %cst_40 = arith.constant 1.000000e+00 : f32
    %164 = vector.broadcast %cst_40 : f32 to vector<2x32xf32>
    %165 = arith.addf %164, %163 : vector<2x32xf32>
    %166 = arith.divf %164, %165 : vector<2x32xf32>
    %167 = vector.extract_strided_slice %154 {offsets = [0, 64], sizes = [2, 32], strides = [1, 1]} : vector<2x128xf32> to vector<2x32xf32>
    %168 = math.tanh %167 : vector<2x32xf32>
    %169 = vector.extract_strided_slice %154 {offsets = [0, 96], sizes = [2, 32], strides = [1, 1]} : vector<2x128xf32> to vector<2x32xf32>
    %170 = arith.negf %169 : vector<2x32xf32>
    %171 = math.exp %170 : vector<2x32xf32>
    %cst_41 = arith.constant 1.000000e+00 : f32
    %172 = vector.broadcast %cst_41 : f32 to vector<2x32xf32>
    %173 = arith.addf %172, %171 : vector<2x32xf32>
    %174 = arith.divf %172, %173 : vector<2x32xf32>
    %175 = arith.mulf %166, %148 : vector<2x32xf32>
    %176 = arith.mulf %160, %168 : vector<2x32xf32>
    %177 = arith.addf %175, %176 : vector<2x32xf32>
    %178 = math.tanh %177 : vector<2x32xf32>
    %179 = arith.mulf %174, %178 : vector<2x32xf32>
    %c6 = arith.constant 6 : index
    %c0_42 = arith.constant 0 : index
    %c0_43 = arith.constant 0 : index
    %180 = vector.load %arg1[%c6, %c0_42, %c0_43] : memref<8x2x128xf32, #tpu.memory_space<vmem>>, vector<1x2x128xf32>
    %181 = vector.shape_cast %180 : vector<1x2x128xf32> to vector<2x128xf32>
    %cst_44 = arith.constant dense<0.000000e+00> : vector<2x128xf32>
    %182 = tpu.matmul %179, %3, %cst_44 {dimension_numbers = #tpu.dot_dimension_numbers<[1], [0], [0], [1], [0, 0, 1, 1], [], []>} : vector<2x32xf32>, vector<32x128xf32>, vector<2x128xf32> -> vector<2x128xf32>
    %183 = arith.addf %181, %182 : vector<2x128xf32>
    %184 = vector.extract_strided_slice %183 {offsets = [0, 0], sizes = [2, 32], strides = [1, 1]} : vector<2x128xf32> to vector<2x32xf32>
    %185 = arith.negf %184 : vector<2x32xf32>
    %186 = math.exp %185 : vector<2x32xf32>
    %cst_45 = arith.constant 1.000000e+00 : f32
    %187 = vector.broadcast %cst_45 : f32 to vector<2x32xf32>
    %188 = arith.addf %187, %186 : vector<2x32xf32>
    %189 = arith.divf %187, %188 : vector<2x32xf32>
    %190 = vector.extract_strided_slice %183 {offsets = [0, 32], sizes = [2, 32], strides = [1, 1]} : vector<2x128xf32> to vector<2x32xf32>
    %191 = arith.negf %190 : vector<2x32xf32>
    %192 = math.exp %191 : vector<2x32xf32>
    %cst_46 = arith.constant 1.000000e+00 : f32
    %193 = vector.broadcast %cst_46 : f32 to vector<2x32xf32>
    %194 = arith.addf %193, %192 : vector<2x32xf32>
    %195 = arith.divf %193, %194 : vector<2x32xf32>
    %196 = vector.extract_strided_slice %183 {offsets = [0, 64], sizes = [2, 32], strides = [1, 1]} : vector<2x128xf32> to vector<2x32xf32>
    %197 = math.tanh %196 : vector<2x32xf32>
    %198 = vector.extract_strided_slice %183 {offsets = [0, 96], sizes = [2, 32], strides = [1, 1]} : vector<2x128xf32> to vector<2x32xf32>
    %199 = arith.negf %198 : vector<2x32xf32>
    %200 = math.exp %199 : vector<2x32xf32>
    %cst_47 = arith.constant 1.000000e+00 : f32
    %201 = vector.broadcast %cst_47 : f32 to vector<2x32xf32>
    %202 = arith.addf %201, %200 : vector<2x32xf32>
    %203 = arith.divf %201, %202 : vector<2x32xf32>
    %204 = arith.mulf %195, %177 : vector<2x32xf32>
    %205 = arith.mulf %189, %197 : vector<2x32xf32>
    %206 = arith.addf %204, %205 : vector<2x32xf32>
    %207 = math.tanh %206 : vector<2x32xf32>
    %208 = arith.mulf %203, %207 : vector<2x32xf32>
    %c7 = arith.constant 7 : index
    %c0_48 = arith.constant 0 : index
    %c0_49 = arith.constant 0 : index
    %209 = vector.load %arg1[%c7, %c0_48, %c0_49] : memref<8x2x128xf32, #tpu.memory_space<vmem>>, vector<1x2x128xf32>
    %210 = vector.shape_cast %209 : vector<1x2x128xf32> to vector<2x128xf32>
    %cst_50 = arith.constant dense<0.000000e+00> : vector<2x128xf32>
    %211 = tpu.matmul %208, %3, %cst_50 {dimension_numbers = #tpu.dot_dimension_numbers<[1], [0], [0], [1], [0, 0, 1, 1], [], []>} : vector<2x32xf32>, vector<32x128xf32>, vector<2x128xf32> -> vector<2x128xf32>
    %212 = arith.addf %210, %211 : vector<2x128xf32>
    %213 = vector.extract_strided_slice %212 {offsets = [0, 0], sizes = [2, 32], strides = [1, 1]} : vector<2x128xf32> to vector<2x32xf32>
    %214 = arith.negf %213 : vector<2x32xf32>
    %215 = math.exp %214 : vector<2x32xf32>
    %cst_51 = arith.constant 1.000000e+00 : f32
    %216 = vector.broadcast %cst_51 : f32 to vector<2x32xf32>
    %217 = arith.addf %216, %215 : vector<2x32xf32>
    %218 = arith.divf %216, %217 : vector<2x32xf32>
    %219 = vector.extract_strided_slice %212 {offsets = [0, 32], sizes = [2, 32], strides = [1, 1]} : vector<2x128xf32> to vector<2x32xf32>
    %220 = arith.negf %219 : vector<2x32xf32>
    %221 = math.exp %220 : vector<2x32xf32>
    %cst_52 = arith.constant 1.000000e+00 : f32
    %222 = vector.broadcast %cst_52 : f32 to vector<2x32xf32>
    %223 = arith.addf %222, %221 : vector<2x32xf32>
    %224 = arith.divf %222, %223 : vector<2x32xf32>
    %225 = vector.extract_strided_slice %212 {offsets = [0, 64], sizes = [2, 32], strides = [1, 1]} : vector<2x128xf32> to vector<2x32xf32>
    %226 = math.tanh %225 : vector<2x32xf32>
    %227 = vector.extract_strided_slice %212 {offsets = [0, 96], sizes = [2, 32], strides = [1, 1]} : vector<2x128xf32> to vector<2x32xf32>
    %228 = arith.negf %227 : vector<2x32xf32>
    %229 = math.exp %228 : vector<2x32xf32>
    %cst_53 = arith.constant 1.000000e+00 : f32
    %230 = vector.broadcast %cst_53 : f32 to vector<2x32xf32>
    %231 = arith.addf %230, %229 : vector<2x32xf32>
    %232 = arith.divf %230, %231 : vector<2x32xf32>
    %233 = arith.mulf %224, %206 : vector<2x32xf32>
    %234 = arith.mulf %218, %226 : vector<2x32xf32>
    %235 = arith.addf %233, %234 : vector<2x32xf32>
    %236 = math.tanh %235 : vector<2x32xf32>
    %237 = arith.mulf %232, %236 : vector<2x32xf32>
    %c0_54 = arith.constant 0 : index
    %c0_55 = arith.constant 0 : index
    %238 = vector.load %arg7[%c0_54, %c0_55] : memref<2x32xf32, #tpu.memory_space<vmem>>, vector<2x32xf32>
    tpu.vector_store %arg7[%c0_54, %c0_55], %237 {strides = array<i32>} : memref<2x32xf32, #tpu.memory_space<vmem>>, vector<2x32xf32>,
    %c0_56 = arith.constant 0 : index
    %c0_57 = arith.constant 0 : index
    %239 = vector.load %arg8[%c0_56, %c0_57] : memref<2x32xf32, #tpu.memory_space<vmem>>, vector<2x32xf32>
    tpu.vector_store %arg8[%c0_56, %c0_57], %235 {strides = array<i32>} : memref<2x32xf32, #tpu.memory_space<vmem>>, vector<2x32xf32>,
    %c0_i32_58 = arith.constant 0 : i32
    %240 = arith.cmpi eq, %arg0, %c0_i32_58 : i32
    %241 = arith.extui %240 : i1 to i32
    %c0_i32_59 = arith.constant 0 : i32
    %242 = arith.cmpi ne, %241, %c0_i32_59 : i32
    scf.if %242 {
      %c0_60 = arith.constant 0 : index
      %c0_61 = arith.constant 0 : index
      %243 = vector.load %arg3[%c0_60, %c0_61] : memref<32x3xf32, #tpu.memory_space<vmem>>, vector<32x3xf32>
      %cst_62 = arith.constant dense<0.000000e+00> : vector<2x3xf32>
      %244 = tpu.matmul %237, %243, %cst_62 {dimension_numbers = #tpu.dot_dimension_numbers<[1], [0], [0], [1], [0, 0, 1, 1], [], []>} : vector<2x32xf32>, vector<32x3xf32>, vector<2x3xf32> -> vector<2x3xf32>
      %c0_63 = arith.constant 0 : index
      %c0_64 = arith.constant 0 : index
      %245 = vector.load %arg4[%c0_63, %c0_64] : memref<1x3xf32, #tpu.memory_space<vmem>>, vector<1x3xf32>
      %246 = vector.broadcast %245 : vector<1x3xf32> to vector<2x3xf32>
      %247 = arith.addf %244, %246 : vector<2x3xf32>
      %c0_65 = arith.constant 0 : index
      %c0_66 = arith.constant 0 : index
      %248 = vector.load %arg5[%c0_65, %c0_66] : memref<2x3xf32, #tpu.memory_space<vmem>>, vector<2x3xf32>
      tpu.vector_store %arg5[%c0_65, %c0_66], %247 {strides = array<i32>} : memref<2x3xf32, #tpu.memory_space<vmem>>, vector<2x3xf32>,
    } else {
    }
    return
  }
  func.func @transform_0(%arg0: i32) -> (i32, i32, i32) {
    %c0_i32 = arith.constant 0 : i32
    %c0_i32_0 = arith.constant 0 : i32
    %c0_i32_1 = arith.constant 0 : i32
    return %arg0, %c0_i32, %c0_i32_0 : i32, i32, i32
  }
  func.func @transform_2(%arg0: i32) -> (i32, i32) {
    %c0_i32 = arith.constant 0 : i32
    %c0_i32_0 = arith.constant 0 : i32
    %c0_i32_1 = arith.constant 0 : i32
    return %c0_i32, %c0_i32_0 : i32, i32
  }
  func.func @transform_3(%arg0: i32) -> (i32, i32) {
    %c0_i32 = arith.constant 0 : i32
    %c0_i32_0 = arith.constant 0 : i32
    %c0_i32_1 = arith.constant 0 : i32
    return %c0_i32, %c0_i32_0 : i32, i32
  }
  func.func @transform_4(%arg0: i32) -> (i32, i32) {
    %c0_i32 = arith.constant 0 : i32
    %c0_i32_0 = arith.constant 0 : i32
    %c0_i32_1 = arith.constant 0 : i32
    return %c0_i32, %c0_i32_0 : i32, i32
  }
}

</mosaic_0001>

<llo_original>
// kernel: lstm_forward.6
$region0: #{lstm_forward.6}
  #allocation0 [shape = 'u32[]', space=smem, size = 0x4, offset = 0x4, fixed_abs, tag = 'smem constant byte address 0x4 - core index']
  #allocation1 [shape = 'u32[72,128]{1,0:T(1,128)}', space=vmem, size = 0x9000, scoped, tag = 'internal scratch']
  %s0 = inlined_call_operand.vmem [shape: f32[16,32], index: 0, kind: input, shape index: {}]
  %s1 = inlined_call_operand.hbm [shape: f32[32,128], index: 1, kind: input, shape index: {}]
  %s2 = inlined_call_operand.vmem [shape: f32[1,128], index: 2, kind: input, shape index: {}]
  %s3 = inlined_call_operand.vmem [shape: f32[16,128], index: 3, kind: output, shape index: {}]
  %s4 = sld [smem:[#allocation0]]
  $region26: #{lstm_forward.6} parent=0
    _
  %s6 = ssub.s32 1, %s4
  %s7 = scalar_select 0, %s6, %s4
  $region1: #{lstm_forward.6} parent=0
    #allocation2 [shape = 'u8[16384]{0}', space=vmem, size = 0x4000, scoped, tag = 'input window, operand 1, single buffered']
    #allocation3 [shape = 's32[1]{0}', space=sflag, size = 0x4, scoped, tag = 'scoped memory for lstm_forward.6']
    %8 = vsyncpa [#allocation3], 0
    // Predicated region
    $region2: #{lstm_forward.6} parent=1 // pred_check
      _
    $region3: #{lstm_forward.6} parent=1 // pred_check_branch
      %10 = sbr.rel (0) target = $region5
    $region4: #{lstm_forward.6} parent=1 // pred_region
      _
    $region5: #{lstm_forward.6} parent=1 // pred_fallthru
      _
    // Predicated region
    $region6: #{lstm_forward.6} parent=1 // pred_check
      _
    $region7: #{lstm_forward.6} parent=1 // pred_check_branch
      %12 = sbr.rel (0) target = $region9
    $region8: #{lstm_forward.6} parent=1 // pred_region
      %14 = vsyncadd [#allocation3], 0
      %s15 = sshll.u32 %s1, 4
      %s16 = int_to_ptr.hbm [resolvable:$true] %s15
      %s17 = sshll.u32 [#allocation2], 4
      %s18 = int_to_ptr.vmem [resolvable:$true] %s17
      %23 = dma.hbm_to_vmem [thread:$0]  %s16, 512, %s18, [#allocation3], 128, 128, 8
    $region9: #{lstm_forward.6} parent=1 // pred_fallthru
      _
    // Predicated region
    $region10: #{lstm_forward.6} parent=1 // pred_check
      _
    $region11: #{lstm_forward.6} parent=1 // pred_check_branch
      %25 = sbr.rel (0) target = $region13
    $region12: #{lstm_forward.6} parent=1 // pred_region
      _
    $region13: #{lstm_forward.6} parent=1 // pred_fallthru
      _
    // Predicated region
    $region14: #{lstm_forward.6} parent=1 // pred_check
      _
    $region15: #{lstm_forward.6} parent=1 // pred_check_branch
      %27 = sbr.rel (0) target = $region17
    $region16: #{lstm_forward.6} parent=1 // pred_region
      %29 = dma.done [#allocation3], 512
    $region17: #{lstm_forward.6} parent=1 // pred_fallthru
      _
    %v30 = vld [vmem:[%s0] sm:$0xff]
    %v31 = vld [vmem:[%s0 + $0x8] sm:$0xff]
    %v32 = vld [vmem:[#allocation2] sm:$0xff]
    %v33 = vld [vmem:[#allocation2 + $0x8] sm:$0xff]
    %v34 = vld [vmem:[#allocation2 + $0x10] sm:$0xff]
    %v35 = vld [vmem:[#allocation2 + $0x18] sm:$0xff]
    %v36 = vld [vmem:[%s2] sm:$0x1]
    %v38 = vperm.slane %v36, 0
    %vm40 = vcmask 261120
    %v42 = vsel %vm40, %v30, 0
    %v45 = vsel %vm40, %v31, 0
    %47 = vmatpush.msra.mxu0 0.0
    %48 = vmatpush.msra.mxu0 0.0
    %49 = vmatpush.msra.mxu0 0.0
    %50 = vmatpush.msra.mxu0 0.0
    %51 = vmatpush.msra.mxu0 0.0
    %52 = vmatpush.msra.mxu0 0.0
    %53 = vmatpush.msra.mxu0 0.0
    %54 = vmatpush.msra.mxu0 0.0
    %55 = vmatpush.msra.mxu0 0.0
    %56 = vmatpush.msra.mxu0 0.0
    %57 = vmatpush.msra.mxu0 0.0
    %58 = vmatpush.msra.mxu0 0.0
    %59 = vmatpush.msra.mxu0 %v35
    %60 = vmatpush.msra.mxu0 %v34
    %61 = vmatpush.msra.mxu0 %v33
    %62 = vmatpush.msra.mxu0 %v32
    %63 = vmatmul.f32.gmra.mxu0 %v42
    %v64 = vpop.f32.mrf.mxu0
    %v65 = vadd.f32 %v38, %v64
    %66 = vmatmul.f32.gmra.mxu0 %v45
    %v67 = vpop.f32.mrf.mxu0
    %v68 = vadd.f32 %v38, %v67
    %69 = vdwg.mxu0
    %70 = vst [vmem:[%s3] sm:$0xff] %v65
    %71 = vst [vmem:[%s3 + $0x8] sm:$0xff] %v68
    // Predicated region
    $region18: #{lstm_forward.6} parent=1 // pred_check
      _
    $region19: #{lstm_forward.6} parent=1 // pred_check_branch
      %73 = sbr.rel (0) target = $region21
    $region20: #{lstm_forward.6} parent=1 // pred_region
      _
    $region21: #{lstm_forward.6} parent=1 // pred_fallthru
      _
    // Predicated region
    $region22: #{lstm_forward.6} parent=1 // pred_check
      _
    $region23: #{lstm_forward.6} parent=1 // pred_check_branch
      %75 = sbr.rel (0) target = $region25
    $region24: #{lstm_forward.6} parent=1 // pred_region
      _
    $region25: #{lstm_forward.6} parent=1 // pred_fallthru
      _
    %76 = vsyncpa [#allocation3], 1

// kernel: lstm_forward.4
$region0: #{lstm_forward.4}
  #allocation0 [shape = 'u32[]', space=smem, size = 0x4, offset = 0x4, fixed_abs, tag = 'smem constant byte address 0x4 - core index']
  #allocation1 [shape = 'u32[72,128]{1,0:T(1,128)}', space=vmem, size = 0x9000, scoped, tag = 'internal scratch']
  %s0 = inlined_call_operand.vmem [shape: f32[16,4], index: 0, kind: input, shape index: {}]
  %s1 = inlined_call_operand.vmem [shape: f32[4,128], index: 1, kind: input, shape index: {}]
  %s2 = inlined_call_operand.vmem [shape: f32[1,128], index: 2, kind: input, shape index: {}]
  %s3 = inlined_call_operand.vmem [shape: f32[16,128], index: 3, kind: output, shape index: {}]
  %s4 = sld [smem:[#allocation0]]
  $region22: #{lstm_forward.4} parent=0
    _
  %s6 = ssub.s32 1, %s4
  %s7 = scalar_select 0, %s6, %s4
  // Predicated region
  $region2: #{lstm_forward.4} parent=0 // pred_check
    _
  $region3: #{lstm_forward.4} parent=0 // pred_check_branch
    %9 = sbr.rel (0) target = $region5
  $region4: #{lstm_forward.4} parent=0 // pred_region
    _
  $region5: #{lstm_forward.4} parent=0 // pred_fallthru
    _
  // Predicated region
  $region6: #{lstm_forward.4} parent=0 // pred_check
    _
  $region7: #{lstm_forward.4} parent=0 // pred_check_branch
    %11 = sbr.rel (0) target = $region9
  $region8: #{lstm_forward.4} parent=0 // pred_region
    _
  $region9: #{lstm_forward.4} parent=0 // pred_fallthru
    _
  // Predicated region
  $region10: #{lstm_forward.4} parent=0 // pred_check
    _
  $region11: #{lstm_forward.4} parent=0 // pred_check_branch
    %13 = sbr.rel (0) target = $region13
  $region12: #{lstm_forward.4} parent=0 // pred_region
    _
  $region13: #{lstm_forward.4} parent=0 // pred_fallthru
    _
  %v14 = vld [vmem:[%s0] sm:$0xff]
  %v15 = vld [vmem:[%s0 + $0x8] sm:$0xff]
  %v16 = vld [vmem:[%s1] sm:$0xf]
  %v17 = vld [vmem:[%s2] sm:$0x1]
  %v19 = vperm.slane %v17, 0
  %vm21 = vcmask 31744
  %v23 = vsel %vm21, %v14, 0
  %v26 = vsel %vm21, %v15, 0
  %vm28 = vcmask 1043456
  %v30 = vsel %vm28, %v16, 0
  %32 = vmatpush.msra.mxu0 0.0
  %33 = vmatpush.msra.mxu0 0.0
  %34 = vmatpush.msra.mxu0 0.0
  %35 = vmatpush.msra.mxu0 0.0
  %36 = vmatpush.msra.mxu0 0.0
  %37 = vmatpush.msra.mxu0 0.0
  %38 = vmatpush.msra.mxu0 0.0
  %39 = vmatpush.msra.mxu0 0.0
  %40 = vmatpush.msra.mxu0 0.0
  %41 = vmatpush.msra.mxu0 0.0
  %42 = vmatpush.msra.mxu0 0.0
  %43 = vmatpush.msra.mxu0 0.0
  %44 = vmatpush.msra.mxu0 0.0
  %45 = vmatpush.msra.mxu0 0.0
  %46 = vmatpush.msra.mxu0 0.0
  %47 = vmatpush.msra.mxu0 %v30
  %48 = vmatmul.f32.gmra.mxu0 %v23
  %v49 = vpop.f32.mrf.mxu0
  %v50 = vadd.f32 %v19, %v49
  %51 = vmatmul.f32.gmra.mxu0 %v26
  %v52 = vpop.f32.mrf.mxu0
  %v53 = vadd.f32 %v19, %v52
  %54 = vdwg.mxu0
  %55 = vst [vmem:[%s3] sm:$0xff] %v50
  %56 = vst [vmem:[%s3 + $0x8] sm:$0xff] %v53
  // Predicated region
  $region14: #{lstm_forward.4} parent=0 // pred_check
    _
  $region15: #{lstm_forward.4} parent=0 // pred_check_branch
    %58 = sbr.rel (0) target = $region17
  $region16: #{lstm_forward.4} parent=0 // pred_region
    _
  $region17: #{lstm_forward.4} parent=0 // pred_fallthru
    _
  // Predicated region
  $region18: #{lstm_forward.4} parent=0 // pred_check
    _
  $region19: #{lstm_forward.4} parent=0 // pred_check_branch
    %60 = sbr.rel (0) target = $region21
  $region20: #{lstm_forward.4} parent=0 // pred_region
    _
  $region21: #{lstm_forward.4} parent=0 // pred_fallthru
    _

// kernel: lstm_forward.5
$region0: #{lstm_forward.5}
  #allocation0 [shape = 'u32[]', space=smem, size = 0x4, offset = 0x4, fixed_abs, tag = 'smem constant byte address 0x4 - core index']
  #allocation1 [shape = 'u32[72,128]{1,0:T(1,128)}', space=vmem, size = 0x9000, scoped, tag = 'internal scratch']
  #allocation2 [shape = 'f32[32,128]{1,0:T(8,128)}', space=vmem, size = 0x4000, scoped, tag = 'scratch operand']
  #allocation3 [shape = 'f32[2,32]{1,0:T(2,128)}', space=vmem, size = 0x400, scoped, tag = 'scratch operand']
  #allocation4 [shape = 'f32[2,32]{1,0:T(2,128)}', space=vmem, size = 0x400, scoped, tag = 'scratch operand']
  #allocation5 [shape = 's32[1]{0}', space=sflag, size = 0x4, scoped, tag = 'scratch operand']
  #allocation6 [shape = 's32[]', space=sflag, size = 0x4, offset = 0, fixed_abs, tag = 'sflag constant byte address 0x0 - dummy sync flag']
  #allocation7 [shape = 's32[]', space=sflag, size = 0x4, offset = 0, fixed_abs, tag = 'sflag constant byte address 0x0 - dummy sync flag']
  #allocation8 [shape = 'u32[]', space=smem, size = 0x4, offset = 0x44, fixed_abs, tag = 'smem constant byte address 0x44 - assertion arg 0']
  #allocation9 [shape = 'u32[]', space=smem, size = 0x4, offset = 0x48, fixed_abs, tag = 'smem constant byte address 0x48 - assertion arg 1']
  %s0 = inlined_call_operand.vmem [shape: f32[8,2,128], index: 0, kind: input, shape index: {}]
  %s1 = inlined_call_operand.hbm [shape: f32[32,128], index: 1, kind: input, shape index: {}]
  %s2 = inlined_call_operand.vmem [shape: f32[8,2,32], index: 2, kind: output, shape index: {}]
  %s3 = sld [smem:[#allocation0]]
  $region22: #{lstm_forward.5} parent=0
    _
  %s5 = ssub.s32 1, %s3
  %s6 = scalar_select 0, %s5, %s3
  // Predicated region
  $region2: #{lstm_forward.5} parent=0 // pred_check
    _
  $region3: #{lstm_forward.5} parent=0 // pred_check_branch
    %8 = sbr.rel (0) target = $region5
  $region4: #{lstm_forward.5} parent=0 // pred_region
    _
  $region5: #{lstm_forward.5} parent=0 // pred_fallthru
    _
  %p9 = scmp.eq.s32.totalorder 0, 0
  // Predicated region
  $region6: #{lstm_forward.5} parent=0 // pred_check
    %p10 = pneg %p9
  $region7: #{lstm_forward.5} parent=0 // pred_check_branch
    %12 = sbr.rel (%p10) target = $region9
  $region8: #{lstm_forward.5} parent=0 // pred_region
    %vm13 = vcmask 254976
    %14 = vst.msk [vmem:[#allocation3] sm:$0x3] %vm13, 0.0
    %15 = vst.msk [vmem:[#allocation4] sm:$0x3] %vm13, 0.0
    // Predicated region
    $region10: #{lstm_forward.5} parent=8 // pred_check
      _
    $region11: #{lstm_forward.5} parent=8 // pred_check_branch
      %17 = sbr.rel target = $region13
    $region12: #{lstm_forward.5} parent=8 // pred_region
      %18 = sst [smem:[#allocation8]] [#allocation7]
      %19 = sst [smem:[#allocation9]] [#allocation6]
    $region13: #{lstm_forward.5} parent=8 // pred_fallthru
      _
    %21 = shalt.err (0)
    %s23 = sshll.u32 %s1, 4
    %s24 = int_to_ptr.hbm [resolvable:$true] %s23
    %s25 = sshll.u32 [#allocation2], 4
    %s26 = int_to_ptr.vmem [resolvable:$true] %s25
    %28 = dma.hbm_to_vmem [thread:$0]  %s24, 512, %s26, [#allocation5]
    %s29 = smul.u32 32, 1
    %s30 = sshll.u32 %s29, 4
    %31 = dma.done [#allocation5], %s30
  $region9: #{lstm_forward.5} parent=0 // pred_fallthru
    _
  %v32 = vld [vmem:[#allocation2] sm:$0xff]
  %v33 = vld [vmem:[#allocation2 + $0x8] sm:$0xff]
  %v34 = vld [vmem:[#allocation2 + $0x10] sm:$0xff]
  %v35 = vld [vmem:[#allocation2 + $0x18] sm:$0xff]
  %v36 = vld [vmem:[#allocation3] sm:$0x3]
  %v37 = vld [vmem:[#allocation4] sm:$0x3]
  %v38 = vld [vmem:[%s0] sm:$0x3]
  %vm39 = vcmask 261120
  %v41 = vsel %vm39, %v36, 0
  %43 = vmatpush.msra.mxu0 0.0
  %44 = vmatpush.msra.mxu0 0.0
  %45 = vmatpush.msra.mxu0 0.0
  %46 = vmatpush.msra.mxu0 0.0
  %47 = vmatpush.msra.mxu0 0.0
  %48 = vmatpush.msra.mxu0 0.0
  %49 = vmatpush.msra.mxu0 0.0
  %50 = vmatpush.msra.mxu0 0.0
  %51 = vmatpush.msra.mxu0 0.0
  %52 = vmatpush.msra.mxu0 0.0
  %53 = vmatpush.msra.mxu0 0.0
  %54 = vmatpush.msra.mxu0 0.0
  %55 = vmatpush.msra.mxu0 %v35
  %56 = vmatpush.msra.mxu0 %v34
  %57 = vmatpush.msra.mxu0 %v33
  %58 = vmatpush.msra.mxu0 %v32
  %59 = vmatmul.f32.gmra.mxu0 %v41
  %v60 = vpop.f32.mrf.mxu0
  %v61 = vadd.f32 0.0, %v60
  %62 = vdwg.mxu0
  %v63 = vadd.f32 %v38, %v61
  %v64 = vxor.u32 %v63, 2147483648
  %v65 = vmul.f32 %v64, 1.442695
  %v66 = vpow.pop %v65
  %v67 = vadd.f32 %v66, 1.0
  %v68 = vrcp.pop %v67
  %v69 = vmul.f32 %v67, %v68
  %v70 = vsub.f32 1.0, %v69
  %v71 = vmul.f32 %v68, %v70
  %v72 = vadd.f32 %v68, %v71
  %vm73 = vweird.f32 %v67
  %vm74 = vweird.f32 %v68
  %vm75 = vmor %vm73, %vm74
  %v76 = vsel %vm75, %v68, %v72
  %v77 = vand.u32 2147483647, %v67
  %vm78 = vcmp.eq.f32.partialorder %v77, 8.507059e+37
  %v79 = vand.u32 %v67, 2147483648
  %v80 = vor.u32 1.1754944e-38, %v79
  %v81 = vsel %vm78, %v80, %v76
  %v82 = vmul.f32 1.0, %v81
  %v83 = vtanh.pop %v63
  %85 = vrot.lane.b32.xlu0 %v37, 32
  %v86 = vpop.permute.xlu0 %85
  %v88 = vmul.f32 %v82, %v86
  %90 = vrot.lane.b32.xlu0 %v83, 64
  %v91 = vpop.permute.xlu0 %90
  %v93 = vmul.f32 %v82, %v91
  %95 = vrot.lane.b32.xlu0 %v93, 32
  %v96 = vpop.permute.xlu0 %95
  %v98 = vadd.f32 %v88, %v96
  %v99 = vtanh.pop %v98
  %101 = vrot.lane.b32.xlu0 %v99, 64
  %v102 = vpop.permute.xlu0 %101
  %v104 = vmul.f32 %v82, %v102
  %106 = vrot.lane.b32.xlu0 %v104, 32
  %v107 = vpop.permute.xlu0 %106
  %vm109 = vcmask 254976
  %110 = vst.msk [vmem:[%s2] sm:$0x3] %vm109, %v107
  %s111 = scalar_lea.vmem %s0, 2
  %v112 = vld [vmem:[%s111] sm:$0x3]
  %v113 = vsel %vm39, %v107, 0
  %115 = vmatpush.msra.mxu0 0.0
  %116 = vmatpush.msra.mxu0 0.0
  %117 = vmatpush.msra.mxu0 0.0
  %118 = vmatpush.msra.mxu0 0.0
  %119 = vmatpush.msra.mxu0 0.0
  %120 = vmatpush.msra.mxu0 0.0
  %121 = vmatpush.msra.mxu0 0.0
  %122 = vmatpush.msra.mxu0 0.0
  %123 = vmatpush.msra.mxu0 0.0
  %124 = vmatpush.msra.mxu0 0.0
  %125 = vmatpush.msra.mxu0 0.0
  %126 = vmatpush.msra.mxu0 0.0
  %127 = vmatpush.msra.mxu0 %v35
  %128 = vmatpush.msra.mxu0 %v34
  %129 = vmatpush.msra.mxu0 %v33
  %130 = vmatpush.msra.mxu0 %v32
  %131 = vmatmul.f32.gmra.mxu0 %v113
  %v132 = vpop.f32.mrf.mxu0
  %v133 = vadd.f32 0.0, %v132
  %134 = vdwg.mxu0
  %v135 = vadd.f32 %v112, %v133
  %v136 = vxor.u32 %v135, 2147483648
  %v137 = vmul.f32 %v136, 1.442695
  %v138 = vpow.pop %v137
  %v139 = vadd.f32 %v138, 1.0
  %v140 = vrcp.pop %v139
  %v141 = vmul.f32 %v139, %v140
  %v142 = vsub.f32 1.0, %v141
  %v143 = vmul.f32 %v140, %v142
  %v144 = vadd.f32 %v140, %v143
  %vm145 = vweird.f32 %v139
  %vm146 = vweird.f32 %v140
  %vm147 = vmor %vm145, %vm146
  %v148 = vsel %vm147, %v140, %v144
  %v149 = vand.u32 2147483647, %v139
  %vm150 = vcmp.eq.f32.partialorder %v149, 8.507059e+37
  %v151 = vand.u32 %v139, 2147483648
  %v152 = vor.u32 1.1754944e-38, %v151
  %v153 = vsel %vm150, %v152, %v148
  %v154 = vmul.f32 1.0, %v153
  %v155 = vtanh.pop %v135
  %v156 = vmul.f32 %v154, %v98
  %158 = vrot.lane.b32.xlu0 %v155, 64
  %v159 = vpop.permute.xlu0 %158
  %v161 = vmul.f32 %v154, %v159
  %163 = vrot.lane.b32.xlu0 %v161, 32
  %v164 = vpop.permute.xlu0 %163
  %v166 = vadd.f32 %v156, %v164
  %v167 = vtanh.pop %v166
  %169 = vrot.lane.b32.xlu0 %v167, 64
  %v170 = vpop.permute.xlu0 %169
  %v172 = vmul.f32 %v154, %v170
  %174 = vrot.lane.b32.xlu0 %v172, 32
  %v175 = vpop.permute.xlu0 %174
  %s177 = scalar_lea.vmem %s2, 2
  %178 = vst.msk [vmem:[%s177] sm:$0x3] %vm109, %v175
  %s179 = scalar_lea.vmem %s0, 4
  %v180 = vld [vmem:[%s179] sm:$0x3]
  %v181 = vsel %vm39, %v175, 0
  %183 = vmatpush.msra.mxu0 0.0
  %184 = vmatpush.msra.mxu0 0.0
  %185 = vmatpush.msra.mxu0 0.0
  %186 = vmatpush.msra.mxu0 0.0
  %187 = vmatpush.msra.mxu0 0.0
  %188 = vmatpush.msra.mxu0 0.0
  %189 = vmatpush.msra.mxu0 0.0
  %190 = vmatpush.msra.mxu0 0.0
  %191 = vmatpush.msra.mxu0 0.0
  %192 = vmatpush.msra.mxu0 0.0
  %193 = vmatpush.msra.mxu0 0.0
  %194 = vmatpush.msra.mxu0 0.0
  %195 = vmatpush.msra.mxu0 %v35
  %196 = vmatpush.msra.mxu0 %v34
  %197 = vmatpush.msra.mxu0 %v33
  %198 = vmatpush.msra.mxu0 %v32
  %199 = vmatmul.f32.gmra.mxu0 %v181
  %v200 = vpop.f32.mrf.mxu0
  %v201 = vadd.f32 0.0, %v200
  %202 = vdwg.mxu0
  %v203 = vadd.f32 %v180, %v201
  %v204 = vxor.u32 %v203, 2147483648
  %v205 = vmul.f32 %v204, 1.442695
  %v206 = vpow.pop %v205
  %v207 = vadd.f32 %v206, 1.0
  %v208 = vrcp.pop %v207
  %v209 = vmul.f32 %v207, %v208
  %v210 = vsub.f32 1.0, %v209
  %v211 = vmul.f32 %v208, %v210
  %v212 = vadd.f32 %v208, %v211
  %vm213 = vweird.f32 %v207
  %vm214 = vweird.f32 %v208
  %vm215 = vmor %vm213, %vm214
  %v216 = vsel %vm215, %v208, %v212
  %v217 = vand.u32 2147483647, %v207
  %vm218 = vcmp.eq.f32.partialorder %v217, 8.507059e+37
  %v219 = vand.u32 %v207, 2147483648
  %v220 = vor.u32 1.1754944e-38, %v219
  %v221 = vsel %vm218, %v220, %v216
  %v222 = vmul.f32 1.0, %v221
  %v223 = vtanh.pop %v203
  %v224 = vmul.f32 %v222, %v166
  %226 = vrot.lane.b32.xlu0 %v223, 64
  %v227 = vpop.permute.xlu0 %226
  %v229 = vmul.f32 %v222, %v227
  %231 = vrot.lane.b32.xlu0 %v229, 32
  %v232 = vpop.permute.xlu0 %231
  %v234 = vadd.f32 %v224, %v232
  %v235 = vtanh.pop %v234
  %237 = vrot.lane.b32.xlu0 %v235, 64
  %v238 = vpop.permute.xlu0 %237
  %v240 = vmul.f32 %v222, %v238
  %242 = vrot.lane.b32.xlu0 %v240, 32
  %v243 = vpop.permute.xlu0 %242
  %s245 = scalar_lea.vmem %s2, 4
  %246 = vst.msk [vmem:[%s245] sm:$0x3] %vm109, %v243
  %s247 = scalar_lea.vmem %s0, 6
  %v248 = vld [vmem:[%s247] sm:$0x3]
  %v249 = vsel %vm39, %v243, 0
  %251 = vmatpush.msra.mxu0 0.0
  %252 = vmatpush.msra.mxu0 0.0
  %253 = vmatpush.msra.mxu0 0.0
  %254 = vmatpush.msra.mxu0 0.0
  %255 = vmatpush.msra.mxu0 0.0
  %256 = vmatpush.msra.mxu0 0.0
  %257 = vmatpush.msra.mxu0 0.0
  %258 = vmatpush.msra.mxu0 0.0
  %259 = vmatpush.msra.mxu0 0.0
  %260 = vmatpush.msra.mxu0 0.0
  %261 = vmatpush.msra.mxu0 0.0
  %262 = vmatpush.msra.mxu0 0.0
  %263 = vmatpush.msra.mxu0 %v35
  %264 = vmatpush.msra.mxu0 %v34
  %265 = vmatpush.msra.mxu0 %v33
  %266 = vmatpush.msra.mxu0 %v32
  %267 = vmatmul.f32.gmra.mxu0 %v249
  %v268 = vpop.f32.mrf.mxu0
  %v269 = vadd.f32 0.0, %v268
  %270 = vdwg.mxu0
  %v271 = vadd.f32 %v248, %v269
  %v272 = vxor.u32 %v271, 2147483648
  %v273 = vmul.f32 %v272, 1.442695
  %v274 = vpow.pop %v273
  %v275 = vadd.f32 %v274, 1.0
  %v276 = vrcp.pop %v275
  %v277 = vmul.f32 %v275, %v276
  %v278 = vsub.f32 1.0, %v277
  %v279 = vmul.f32 %v276, %v278
  %v280 = vadd.f32 %v276, %v279
  %vm281 = vweird.f32 %v275
  %vm282 = vweird.f32 %v276
  %vm283 = vmor %vm281, %vm282
  %v284 = vsel %vm283, %v276, %v280
  %v285 = vand.u32 2147483647, %v275
  %vm286 = vcmp.eq.f32.partialorder %v285, 8.507059e+37
  %v287 = vand.u32 %v275, 2147483648
  %v288 = vor.u32 1.1754944e-38, %v287
  %v289 = vsel %vm286, %v288, %v284
  %v290 = vmul.f32 1.0, %v289
  %v291 = vtanh.pop %v271
  %v292 = vmul.f32 %v290, %v234
  %294 = vrot.lane.b32.xlu0 %v291, 64
  %v295 = vpop.permute.xlu0 %294
  %v297 = vmul.f32 %v290, %v295
  %299 = vrot.lane.b32.xlu0 %v297, 32
  %v300 = vpop.permute.xlu0 %299
  %v302 = vadd.f32 %v292, %v300
  %v303 = vtanh.pop %v302
  %305 = vrot.lane.b32.xlu0 %v303, 64
  %v306 = vpop.permute.xlu0 %305
  %v308 = vmul.f32 %v290, %v306
  %310 = vrot.lane.b32.xlu0 %v308, 32
  %v311 = vpop.permute.xlu0 %310
  %s313 = scalar_lea.vmem %s2, 6
  %314 = vst.msk [vmem:[%s313] sm:$0x3] %vm109, %v311
  %s315 = scalar_lea.vmem %s0, 8
  %v316 = vld [vmem:[%s315] sm:$0x3]
  %v317 = vsel %vm39, %v311, 0
  %319 = vmatpush.msra.mxu0 0.0
  %320 = vmatpush.msra.mxu0 0.0
  %321 = vmatpush.msra.mxu0 0.0
  %322 = vmatpush.msra.mxu0 0.0
  %323 = vmatpush.msra.mxu0 0.0
  %324 = vmatpush.msra.mxu0 0.0
  %325 = vmatpush.msra.mxu0 0.0
  %326 = vmatpush.msra.mxu0 0.0
  %327 = vmatpush.msra.mxu0 0.0
  %328 = vmatpush.msra.mxu0 0.0
  %329 = vmatpush.msra.mxu0 0.0
  %330 = vmatpush.msra.mxu0 0.0
  %331 = vmatpush.msra.mxu0 %v35
  %332 = vmatpush.msra.mxu0 %v34
  %333 = vmatpush.msra.mxu0 %v33
  %334 = vmatpush.msra.mxu0 %v32
  %335 = vmatmul.f32.gmra.mxu0 %v317
  %v336 = vpop.f32.mrf.mxu0
  %v337 = vadd.f32 0.0, %v336
  %338 = vdwg.mxu0
  %v339 = vadd.f32 %v316, %v337
  %v340 = vxor.u32 %v339, 2147483648
  %v341 = vmul.f32 %v340, 1.442695
  %v342 = vpow.pop %v341
  %v343 = vadd.f32 %v342, 1.0
  %v344 = vrcp.pop %v343
  %v345 = vmul.f32 %v343, %v344
  %v346 = vsub.f32 1.0, %v345
  %v347 = vmul.f32 %v344, %v346
  %v348 = vadd.f32 %v344, %v347
  %vm349 = vweird.f32 %v343
  %vm350 = vweird.f32 %v344
  %vm351 = vmor %vm349, %vm350
  %v352 = vsel %vm351, %v344, %v348
  %v353 = vand.u32 2147483647, %v343
  %vm354 = vcmp.eq.f32.partialorder %v353, 8.507059e+37
  %v355 = vand.u32 %v343, 2147483648
  %v356 = vor.u32 1.1754944e-38, %v355
  %v357 = vsel %vm354, %v356, %v352
  %v358 = vmul.f32 1.0, %v357
  %v359 = vtanh.pop %v339
  %v360 = vmul.f32 %v358, %v302
  %362 = vrot.lane.b32.xlu0 %v359, 64
  %v363 = vpop.permute.xlu0 %362
  %v365 = vmul.f32 %v358, %v363
  %367 = vrot.lane.b32.xlu0 %v365, 32
  %v368 = vpop.permute.xlu0 %367
  %v370 = vadd.f32 %v360, %v368
  %v371 = vtanh.pop %v370
  %373 = vrot.lane.b32.xlu0 %v371, 64
  %v374 = vpop.permute.xlu0 %373
  %v376 = vmul.f32 %v358, %v374
  %378 = vrot.lane.b32.xlu0 %v376, 32
  %v379 = vpop.permute.xlu0 %378
  %s381 = scalar_lea.vmem %s2, 8
  %382 = vst.msk [vmem:[%s381] sm:$0x3] %vm109, %v379
  %s383 = scalar_lea.vmem %s0, 10
  %v384 = vld [vmem:[%s383] sm:$0x3]
  %v385 = vsel %vm39, %v379, 0
  %387 = vmatpush.msra.mxu0 0.0
  %388 = vmatpush.msra.mxu0 0.0
  %389 = vmatpush.msra.mxu0 0.0
  %390 = vmatpush.msra.mxu0 0.0
  %391 = vmatpush.msra.mxu0 0.0
  %392 = vmatpush.msra.mxu0 0.0
  %393 = vmatpush.msra.mxu0 0.0
  %394 = vmatpush.msra.mxu0 0.0
  %395 = vmatpush.msra.mxu0 0.0
  %396 = vmatpush.msra.mxu0 0.0
  %397 = vmatpush.msra.mxu0 0.0
  %398 = vmatpush.msra.mxu0 0.0
  %399 = vmatpush.msra.mxu0 %v35
  %400 = vmatpush.msra.mxu0 %v34
  %401 = vmatpush.msra.mxu0 %v33
  %402 = vmatpush.msra.mxu0 %v32
  %403 = vmatmul.f32.gmra.mxu0 %v385
  %v404 = vpop.f32.mrf.mxu0
  %v405 = vadd.f32 0.0, %v404
  %406 = vdwg.mxu0
  %v407 = vadd.f32 %v384, %v405
  %v408 = vxor.u32 %v407, 2147483648
  %v409 = vmul.f32 %v408, 1.442695
  %v410 = vpow.pop %v409
  %v411 = vadd.f32 %v410, 1.0
  %v412 = vrcp.pop %v411
  %v413 = vmul.f32 %v411, %v412
  %v414 = vsub.f32 1.0, %v413
  %v415 = vmul.f32 %v412, %v414
  %v416 = vadd.f32 %v412, %v415
  %vm417 = vweird.f32 %v411
  %vm418 = vweird.f32 %v412
  %vm419 = vmor %vm417, %vm418
  %v420 = vsel %vm419, %v412, %v416
  %v421 = vand.u32 2147483647, %v411
  %vm422 = vcmp.eq.f32.partialorder %v421, 8.507059e+37
  %v423 = vand.u32 %v411, 2147483648
  %v424 = vor.u32 1.1754944e-38, %v423
  %v425 = vsel %vm422, %v424, %v420
  %v426 = vmul.f32 1.0, %v425
  %v427 = vtanh.pop %v407
  %v428 = vmul.f32 %v426, %v370
  %430 = vrot.lane.b32.xlu0 %v427, 64
  %v431 = vpop.permute.xlu0 %430
  %v433 = vmul.f32 %v426, %v431
  %435 = vrot.lane.b32.xlu0 %v433, 32
  %v436 = vpop.permute.xlu0 %435
  %v438 = vadd.f32 %v428, %v436
  %v439 = vtanh.pop %v438
  %441 = vrot.lane.b32.xlu0 %v439, 64
  %v442 = vpop.permute.xlu0 %441
  %v444 = vmul.f32 %v426, %v442
  %446 = vrot.lane.b32.xlu0 %v444, 32
  %v447 = vpop.permute.xlu0 %446
  %s449 = scalar_lea.vmem %s2, 10
  %450 = vst.msk [vmem:[%s449] sm:$0x3] %vm109, %v447
  %s451 = scalar_lea.vmem %s0, 12
  %v452 = vld [vmem:[%s451] sm:$0x3]
  %v453 = vsel %vm39, %v447, 0
  %455 = vmatpush.msra.mxu0 0.0
  %456 = vmatpush.msra.mxu0 0.0
  %457 = vmatpush.msra.mxu0 0.0
  %458 = vmatpush.msra.mxu0 0.0
  %459 = vmatpush.msra.mxu0 0.0
  %460 = vmatpush.msra.mxu0 0.0
  %461 = vmatpush.msra.mxu0 0.0
  %462 = vmatpush.msra.mxu0 0.0
  %463 = vmatpush.msra.mxu0 0.0
  %464 = vmatpush.msra.mxu0 0.0
  %465 = vmatpush.msra.mxu0 0.0
  %466 = vmatpush.msra.mxu0 0.0
  %467 = vmatpush.msra.mxu0 %v35
  %468 = vmatpush.msra.mxu0 %v34
  %469 = vmatpush.msra.mxu0 %v33
  %470 = vmatpush.msra.mxu0 %v32
  %471 = vmatmul.f32.gmra.mxu0 %v453
  %v472 = vpop.f32.mrf.mxu0
  %v473 = vadd.f32 0.0, %v472
  %474 = vdwg.mxu0
  %v475 = vadd.f32 %v452, %v473
  %v476 = vxor.u32 %v475, 2147483648
  %v477 = vmul.f32 %v476, 1.442695
  %v478 = vpow.pop %v477
  %v479 = vadd.f32 %v478, 1.0
  %v480 = vrcp.pop %v479
  %v481 = vmul.f32 %v479, %v480
  %v482 = vsub.f32 1.0, %v481
  %v483 = vmul.f32 %v480, %v482
  %v484 = vadd.f32 %v480, %v483
  %vm485 = vweird.f32 %v479
  %vm486 = vweird.f32 %v480
  %vm487 = vmor %vm485, %vm486
  %v488 = vsel %vm487, %v480, %v484
  %v489 = vand.u32 2147483647, %v479
  %vm490 = vcmp.eq.f32.partialorder %v489, 8.507059e+37
  %v491 = vand.u32 %v479, 2147483648
  %v492 = vor.u32 1.1754944e-38, %v491
  %v493 = vsel %vm490, %v492, %v488
  %v494 = vmul.f32 1.0, %v493
  %v495 = vtanh.pop %v475
  %v496 = vmul.f32 %v494, %v438
  %498 = vrot.lane.b32.xlu0 %v495, 64
  %v499 = vpop.permute.xlu0 %498
  %v501 = vmul.f32 %v494, %v499
  %503 = vrot.lane.b32.xlu0 %v501, 32
  %v504 = vpop.permute.xlu0 %503
  %v506 = vadd.f32 %v496, %v504
  %v507 = vtanh.pop %v506
  %509 = vrot.lane.b32.xlu0 %v507, 64
  %v510 = vpop.permute.xlu0 %509
  %v512 = vmul.f32 %v494, %v510
  %514 = vrot.lane.b32.xlu0 %v512, 32
  %v515 = vpop.permute.xlu0 %514
  %s517 = scalar_lea.vmem %s2, 12
  %518 = vst.msk [vmem:[%s517] sm:$0x3] %vm109, %v515
  %s519 = scalar_lea.vmem %s0, 14
  %v520 = vld [vmem:[%s519] sm:$0x3]
  %v521 = vsel %vm39, %v515, 0
  %523 = vmatpush.msra.mxu0 0.0
  %524 = vmatpush.msra.mxu0 0.0
  %525 = vmatpush.msra.mxu0 0.0
  %526 = vmatpush.msra.mxu0 0.0
  %527 = vmatpush.msra.mxu0 0.0
  %528 = vmatpush.msra.mxu0 0.0
  %529 = vmatpush.msra.mxu0 0.0
  %530 = vmatpush.msra.mxu0 0.0
  %531 = vmatpush.msra.mxu0 0.0
  %532 = vmatpush.msra.mxu0 0.0
  %533 = vmatpush.msra.mxu0 0.0
  %534 = vmatpush.msra.mxu0 0.0
  %535 = vmatpush.msra.mxu0 %v35
  %536 = vmatpush.msra.mxu0 %v34
  %537 = vmatpush.msra.mxu0 %v33
  %538 = vmatpush.msra.mxu0 %v32
  %539 = vmatmul.f32.gmra.mxu0 %v521
  %v540 = vpop.f32.mrf.mxu0
  %v541 = vadd.f32 0.0, %v540
  %542 = vdwg.mxu0
  %v543 = vadd.f32 %v520, %v541
  %v544 = vxor.u32 %v543, 2147483648
  %v545 = vmul.f32 %v544, 1.442695
  %v546 = vpow.pop %v545
  %v547 = vadd.f32 %v546, 1.0
  %v548 = vrcp.pop %v547
  %v549 = vmul.f32 %v547, %v548
  %v550 = vsub.f32 1.0, %v549
  %v551 = vmul.f32 %v548, %v550
  %v552 = vadd.f32 %v548, %v551
  %vm553 = vweird.f32 %v547
  %vm554 = vweird.f32 %v548
  %vm555 = vmor %vm553, %vm554
  %v556 = vsel %vm555, %v548, %v552
  %v557 = vand.u32 2147483647, %v547
  %vm558 = vcmp.eq.f32.partialorder %v557, 8.507059e+37
  %v559 = vand.u32 %v547, 2147483648
  %v560 = vor.u32 1.1754944e-38, %v559
  %v561 = vsel %vm558, %v560, %v556
  %v562 = vmul.f32 1.0, %v561
  %v563 = vtanh.pop %v543
  %v564 = vmul.f32 %v562, %v506
  %566 = vrot.lane.b32.xlu0 %v563, 64
  %v567 = vpop.permute.xlu0 %566
  %v569 = vmul.f32 %v562, %v567
  %571 = vrot.lane.b32.xlu0 %v569, 32
  %v572 = vpop.permute.xlu0 %571
  %v574 = vadd.f32 %v564, %v572
  %v575 = vtanh.pop %v574
  %577 = vrot.lane.b32.xlu0 %v575, 64
  %v578 = vpop.permute.xlu0 %577
  %v580 = vmul.f32 %v562, %v578
  %582 = vrot.lane.b32.xlu0 %v580, 32
  %v583 = vpop.permute.xlu0 %582
  %s585 = scalar_lea.vmem %s2, 14
  %586 = vst.msk [vmem:[%s585] sm:$0x3] %vm109, %v583
  %587 = vst.msk [vmem:[#allocation3] sm:$0x3] %vm109, %v583
  %589 = vrot.lane.b32.xlu0 %v574, 96
  %v590 = vpop.permute.xlu0 %589
  %592 = vst.msk [vmem:[#allocation4] sm:$0x3] %vm109, %v590
  // Predicated region
  $region14: #{lstm_forward.5} parent=0 // pred_check
    _
  $region15: #{lstm_forward.5} parent=0 // pred_check_branch
    %594 = sbr.rel (0) target = $region17
  $region16: #{lstm_forward.5} parent=0 // pred_region
    _
  $region17: #{lstm_forward.5} parent=0 // pred_fallthru
    _
  // Predicated region
  $region18: #{lstm_forward.5} parent=0 // pred_check
    _
  $region19: #{lstm_forward.5} parent=0 // pred_check_branch
    %596 = sbr.rel (0) target = $region21
  $region20: #{lstm_forward.5} parent=0 // pred_region
    _
  $region21: #{lstm_forward.5} parent=0 // pred_fallthru
    _
  %597 = vsyncmov [#allocation5]
  %s598 = vpop.sfrf %597
  %p599 = scmp.eq.s32.totalorder %s598, 0
  %p600 = pneg %p599
  %602 = shalt.err (%p600)

// kernel: lstm_forward.7
$region0: #{lstm_forward.7}
  #allocation0 [shape = 'u32[]', space=smem, size = 0x4, offset = 0x4, fixed_abs, tag = 'smem constant byte address 0x4 - core index']
  #allocation1 [shape = 'u32[72,128]{1,0:T(1,128)}', space=vmem, size = 0x9000, scoped, tag = 'internal scratch']
  #allocation2 [shape = 'f32[32,128]{1,0:T(8,128)}', space=vmem, size = 0x4000, scoped, tag = 'scratch operand']
  #allocation3 [shape = 'f32[2,32]{1,0:T(2,128)}', space=vmem, size = 0x400, scoped, tag = 'scratch operand']
  #allocation4 [shape = 'f32[2,32]{1,0:T(2,128)}', space=vmem, size = 0x400, scoped, tag = 'scratch operand']
  #allocation5 [shape = 's32[1]{0}', space=sflag, size = 0x4, scoped, tag = 'scratch operand']
  #allocation8 [shape = 's32[]', space=sflag, size = 0x4, offset = 0, fixed_abs, tag = 'sflag constant byte address 0x0 - dummy sync flag']
  %s0 = inlined_call_operand.vmem [shape: f32[8,2,128], index: 0, kind: input, shape index: {}]
  %s1 = inlined_call_operand.vmem [shape: f32[32,128], index: 1, kind: input, shape index: {}]
  %s2 = inlined_call_operand.vmem [shape: f32[32,3], index: 2, kind: input, shape index: {}]
  %s3 = inlined_call_operand.vmem [shape: f32[1,3], index: 3, kind: input, shape index: {}]
  %s4 = inlined_call_operand.hbm [shape: f32[2,3], index: 4, kind: output, shape index: {}]
  %s5 = sld [smem:[#allocation0]]
  $region49: #{lstm_forward.7} parent=0
    _
  %s7 = ssub.s32 1, %s5
  %s8 = scalar_select 0, %s7, %s5
  $region1: #{lstm_forward.7} parent=0
    #allocation6 [shape = 'u8[1024]{0}', space=vmem, size = 0x400, scoped, tag = 'output window, operand 0, single buffered']
    #allocation7 [shape = 's32[1]{0}', space=sflag, size = 0x4, scoped, tag = 'scoped memory for lstm_forward.7']
    %9 = vsyncpa [#allocation7], 0
    // Predicated region
    $region2: #{lstm_forward.7} parent=1 // pred_check
      _
    $region3: #{lstm_forward.7} parent=1 // pred_check_branch
      %11 = sbr.rel (0) target = $region5
    $region4: #{lstm_forward.7} parent=1 // pred_region
      _
    $region5: #{lstm_forward.7} parent=1 // pred_fallthru
      _
    // Predicated region
    $region6: #{lstm_forward.7} parent=1 // pred_check
      _
    $region7: #{lstm_forward.7} parent=1 // pred_check_branch
      %13 = sbr.rel (0) target = $region9
    $region8: #{lstm_forward.7} parent=1 // pred_region
      _
    $region9: #{lstm_forward.7} parent=1 // pred_fallthru
      _
    // Predicated region
    $region10: #{lstm_forward.7} parent=1 // pred_check
      _
    $region11: #{lstm_forward.7} parent=1 // pred_check_branch
      %15 = sbr.rel (0) target = $region13
    $region12: #{lstm_forward.7} parent=1 // pred_region
      _
    $region13: #{lstm_forward.7} parent=1 // pred_fallthru
      _
    %p16 = scmp.eq.s32.totalorder 0, 0
    // Predicated region
    $region14: #{lstm_forward.7} parent=1 // pred_check
      %p17 = pneg %p16
    $region15: #{lstm_forward.7} parent=1 // pred_check_branch
      %19 = sbr.rel (%p17) target = $region17
    $region16: #{lstm_forward.7} parent=1 // pred_region
      %vm20 = vcmask 254976
      %21 = vst.msk [vmem:[#allocation3] sm:$0x3] %vm20, 0.0
      %22 = vst.msk [vmem:[#allocation4] sm:$0x3] %vm20, 0.0
      // Predicated region
      $region18: #{lstm_forward.7} parent=16 // pred_check
        _
      $region19: #{lstm_forward.7} parent=16 // pred_check_branch
        %24 = sbr.rel (0) target = $region21
      $region20: #{lstm_forward.7} parent=16 // pred_region
        loop: start=0, step=1, limit=1
        $region22: #{lstm_forward.7} parent=20 // loop_pre_header
          _
        $region23: #{lstm_forward.7} parent=20 // loop_header
          %s26 = sphi 0, %s30
          %p27 = scmp.ge.s32.totalorder %s26, 1
          %s31 = sphi %s1, %s1
          %s32 = sphi [#allocation2], [#allocation2]
        $region24: #{lstm_forward.7} parent=20 // loop_header_branch
          %29 = sbr.rel (%p27) target = $region28
        $region25: #{lstm_forward.7} parent=20 // loop_body
          %v33 = vld [vmem:[%s31] sm:$0xff]
          %34 = vst [vmem:[%s32] sm:$0xff] %v33
          %v35 = vld [vmem:[%s31 + $0x8] sm:$0xff]
          %36 = vst [vmem:[%s32 + $0x8] sm:$0xff] %v35
          %v37 = vld [vmem:[%s31 + $0x10] sm:$0xff]
          %38 = vst [vmem:[%s32 + $0x10] sm:$0xff] %v37
          %v39 = vld [vmem:[%s31 + $0x18] sm:$0xff]
          %40 = vst [vmem:[%s32 + $0x18] sm:$0xff] %v39
        $region26: #{lstm_forward.7} parent=20 // loop_footer
          %s30 = sadd.s32 1, %s26
        $region27: #{lstm_forward.7} parent=20 // loop_footer_branch
          %25 = sbr.rel target = $region23
        $region28: #{lstm_forward.7} parent=20 // loop_exit
          _
      $region21: #{lstm_forward.7} parent=16 // pred_fallthru
        _
      // Predicated region
      $region29: #{lstm_forward.7} parent=16 // pred_check
        _
      $region30: #{lstm_forward.7} parent=16 // pred_check_branch
        %42 = sbr.rel target = $region32
      $region31: #{lstm_forward.7} parent=16 // pred_region
        _
      $region32: #{lstm_forward.7} parent=16 // pred_fallthru
        _
      // Predicated region
      $region33: #{lstm_forward.7} parent=16 // pred_check
        _
      $region34: #{lstm_forward.7} parent=16 // pred_check_branch
        %45 = sbr.rel (0) target = $region36
      $region35: #{lstm_forward.7} parent=16 // pred_region
        %46 = vsyncadd [#allocation5], 512
      $region36: #{lstm_forward.7} parent=16 // pred_fallthru
        _
      %s47 = smul.u32 32, 1
      %s48 = sshll.u32 %s47, 4
      %49 = dma.done [#allocation5], %s48
    $region17: #{lstm_forward.7} parent=1 // pred_fallthru
      _
    %v50 = vld [vmem:[#allocation2] sm:$0xff]
    %v51 = vld [vmem:[#allocation2 + $0x8] sm:$0xff]
    %v52 = vld [vmem:[#allocation2 + $0x10] sm:$0xff]
    %v53 = vld [vmem:[#allocation2 + $0x18] sm:$0xff]
    %v54 = vld [vmem:[#allocation3] sm:$0x3]
    %v55 = vld [vmem:[#allocation4] sm:$0x3]
    %v56 = vld [vmem:[%s0] sm:$0x3]
    %vm57 = vcmask 261120
    %v59 = vsel %vm57, %v54, 0
    %61 = vmatpush.msra.mxu0 0.0
    %62 = vmatpush.msra.mxu0 0.0
    %63 = vmatpush.msra.mxu0 0.0
    %64 = vmatpush.msra.mxu0 0.0
    %65 = vmatpush.msra.mxu0 0.0
    %66 = vmatpush.msra.mxu0 0.0
    %67 = vmatpush.msra.mxu0 0.0
    %68 = vmatpush.msra.mxu0 0.0
    %69 = vmatpush.msra.mxu0 0.0
    %70 = vmatpush.msra.mxu0 0.0
    %71 = vmatpush.msra.mxu0 0.0
    %72 = vmatpush.msra.mxu0 0.0
    %73 = vmatpush.msra.mxu0 %v53
    %74 = vmatpush.msra.mxu0 %v52
    %75 = vmatpush.msra.mxu0 %v51
    %76 = vmatpush.msra.mxu0 %v50
    %77 = vmatmul.f32.gmra.mxu0 %v59
    %v78 = vpop.f32.mrf.mxu0
    %v79 = vadd.f32 0.0, %v78
    %80 = vdwg.mxu0
    %v81 = vadd.f32 %v56, %v79
    %v82 = vxor.u32 %v81, 2147483648
    %v83 = vmul.f32 %v82, 1.442695
    %v84 = vpow.pop %v83
    %v85 = vadd.f32 %v84, 1.0
    %v86 = vrcp.pop %v85
    %v87 = vmul.f32 %v85, %v86
    %v88 = vsub.f32 1.0, %v87
    %v89 = vmul.f32 %v86, %v88
    %v90 = vadd.f32 %v86, %v89
    %vm91 = vweird.f32 %v85
    %vm92 = vweird.f32 %v86
    %vm93 = vmor %vm91, %vm92
    %v94 = vsel %vm93, %v86, %v90
    %v95 = vand.u32 2147483647, %v85
    %vm96 = vcmp.eq.f32.partialorder %v95, 8.507059e+37
    %v97 = vand.u32 %v85, 2147483648
    %v98 = vor.u32 1.1754944e-38, %v97
    %v99 = vsel %vm96, %v98, %v94
    %v100 = vmul.f32 1.0, %v99
    %v101 = vtanh.pop %v81
    %103 = vrot.lane.b32.xlu0 %v55, 32
    %v104 = vpop.permute.xlu0 %103
    %v106 = vmul.f32 %v100, %v104
    %108 = vrot.lane.b32.xlu0 %v101, 64
    %v109 = vpop.permute.xlu0 %108
    %v111 = vmul.f32 %v100, %v109
    %113 = vrot.lane.b32.xlu0 %v111, 32
    %v114 = vpop.permute.xlu0 %113
    %v116 = vadd.f32 %v106, %v114
    %v117 = vtanh.pop %v116
    %119 = vrot.lane.b32.xlu0 %v117, 64
    %v120 = vpop.permute.xlu0 %119
    %v122 = vmul.f32 %v100, %v120
    %s123 = scalar_lea.vmem %s0, 2
    %v124 = vld [vmem:[%s123] sm:$0x3]
    %126 = vrot.lane.b32.xlu0 %v122, 32
    %v127 = vpop.permute.xlu0 %126
    %v128 = vsel %vm57, %v127, 0
    %130 = vmatpush.msra.mxu0 0.0
    %131 = vmatpush.msra.mxu0 0.0
    %132 = vmatpush.msra.mxu0 0.0
    %133 = vmatpush.msra.mxu0 0.0
    %134 = vmatpush.msra.mxu0 0.0
    %135 = vmatpush.msra.mxu0 0.0
    %136 = vmatpush.msra.mxu0 0.0
    %137 = vmatpush.msra.mxu0 0.0
    %138 = vmatpush.msra.mxu0 0.0
    %139 = vmatpush.msra.mxu0 0.0
    %140 = vmatpush.msra.mxu0 0.0
    %141 = vmatpush.msra.mxu0 0.0
    %142 = vmatpush.msra.mxu0 %v53
    %143 = vmatpush.msra.mxu0 %v52
    %144 = vmatpush.msra.mxu0 %v51
    %145 = vmatpush.msra.mxu0 %v50
    %146 = vmatmul.f32.gmra.mxu0 %v128
    %v147 = vpop.f32.mrf.mxu0
    %v148 = vadd.f32 0.0, %v147
    %149 = vdwg.mxu0
    %v150 = vadd.f32 %v124, %v148
    %v151 = vxor.u32 %v150, 2147483648
    %v152 = vmul.f32 %v151, 1.442695
    %v153 = vpow.pop %v152
    %v154 = vadd.f32 %v153, 1.0
    %v155 = vrcp.pop %v154
    %v156 = vmul.f32 %v154, %v155
    %v157 = vsub.f32 1.0, %v156
    %v158 = vmul.f32 %v155, %v157
    %v159 = vadd.f32 %v155, %v158
    %vm160 = vweird.f32 %v154
    %vm161 = vweird.f32 %v155
    %vm162 = vmor %vm160, %vm161
    %v163 = vsel %vm162, %v155, %v159
    %v164 = vand.u32 2147483647, %v154
    %vm165 = vcmp.eq.f32.partialorder %v164, 8.507059e+37
    %v166 = vand.u32 %v154, 2147483648
    %v167 = vor.u32 1.1754944e-38, %v166
    %v168 = vsel %vm165, %v167, %v163
    %v169 = vmul.f32 1.0, %v168
    %v170 = vtanh.pop %v150
    %v171 = vmul.f32 %v169, %v116
    %173 = vrot.lane.b32.xlu0 %v170, 64
    %v174 = vpop.permute.xlu0 %173
    %v176 = vmul.f32 %v169, %v174
    %178 = vrot.lane.b32.xlu0 %v176, 32
    %v179 = vpop.permute.xlu0 %178
    %v181 = vadd.f32 %v171, %v179
    %v182 = vtanh.pop %v181
    %184 = vrot.lane.b32.xlu0 %v182, 64
    %v185 = vpop.permute.xlu0 %184
    %v187 = vmul.f32 %v169, %v185
    %s188 = scalar_lea.vmem %s0, 4
    %v189 = vld [vmem:[%s188] sm:$0x3]
    %191 = vrot.lane.b32.xlu0 %v187, 32
    %v192 = vpop.permute.xlu0 %191
    %v193 = vsel %vm57, %v192, 0
    %195 = vmatpush.msra.mxu0 0.0
    %196 = vmatpush.msra.mxu0 0.0
    %197 = vmatpush.msra.mxu0 0.0
    %198 = vmatpush.msra.mxu0 0.0
    %199 = vmatpush.msra.mxu0 0.0
    %200 = vmatpush.msra.mxu0 0.0
    %201 = vmatpush.msra.mxu0 0.0
    %202 = vmatpush.msra.mxu0 0.0
    %203 = vmatpush.msra.mxu0 0.0
    %204 = vmatpush.msra.mxu0 0.0
    %205 = vmatpush.msra.mxu0 0.0
    %206 = vmatpush.msra.mxu0 0.0
    %207 = vmatpush.msra.mxu0 %v53
    %208 = vmatpush.msra.mxu0 %v52
    %209 = vmatpush.msra.mxu0 %v51
    %210 = vmatpush.msra.mxu0 %v50
    %211 = vmatmul.f32.gmra.mxu0 %v193
    %v212 = vpop.f32.mrf.mxu0
    %v213 = vadd.f32 0.0, %v212
    %214 = vdwg.mxu0
    %v215 = vadd.f32 %v189, %v213
    %v216 = vxor.u32 %v215, 2147483648
    %v217 = vmul.f32 %v216, 1.442695
    %v218 = vpow.pop %v217
    %v219 = vadd.f32 %v218, 1.0
    %v220 = vrcp.pop %v219
    %v221 = vmul.f32 %v219, %v220
    %v222 = vsub.f32 1.0, %v221
    %v223 = vmul.f32 %v220, %v222
    %v224 = vadd.f32 %v220, %v223
    %vm225 = vweird.f32 %v219
    %vm226 = vweird.f32 %v220
    %vm227 = vmor %vm225, %vm226
    %v228 = vsel %vm227, %v220, %v224
    %v229 = vand.u32 2147483647, %v219
    %vm230 = vcmp.eq.f32.partialorder %v229, 8.507059e+37
    %v231 = vand.u32 %v219, 2147483648
    %v232 = vor.u32 1.1754944e-38, %v231
    %v233 = vsel %vm230, %v232, %v228
    %v234 = vmul.f32 1.0, %v233
    %v235 = vtanh.pop %v215
    %v236 = vmul.f32 %v234, %v181
    %238 = vrot.lane.b32.xlu0 %v235, 64
    %v239 = vpop.permute.xlu0 %238
    %v241 = vmul.f32 %v234, %v239
    %243 = vrot.lane.b32.xlu0 %v241, 32
    %v244 = vpop.permute.xlu0 %243
    %v246 = vadd.f32 %v236, %v244
    %v247 = vtanh.pop %v246
    %249 = vrot.lane.b32.xlu0 %v247, 64
    %v250 = vpop.permute.xlu0 %249
    %v252 = vmul.f32 %v234, %v250
    %s253 = scalar_lea.vmem %s0, 6
    %v254 = vld [vmem:[%s253] sm:$0x3]
    %256 = vrot.lane.b32.xlu0 %v252, 32
    %v257 = vpop.permute.xlu0 %256
    %v258 = vsel %vm57, %v257, 0
    %260 = vmatpush.msra.mxu0 0.0
    %261 = vmatpush.msra.mxu0 0.0
    %262 = vmatpush.msra.mxu0 0.0
    %263 = vmatpush.msra.mxu0 0.0
    %264 = vmatpush.msra.mxu0 0.0
    %265 = vmatpush.msra.mxu0 0.0
    %266 = vmatpush.msra.mxu0 0.0
    %267 = vmatpush.msra.mxu0 0.0
    %268 = vmatpush.msra.mxu0 0.0
    %269 = vmatpush.msra.mxu0 0.0
    %270 = vmatpush.msra.mxu0 0.0
    %271 = vmatpush.msra.mxu0 0.0
    %272 = vmatpush.msra.mxu0 %v53
    %273 = vmatpush.msra.mxu0 %v52
    %274 = vmatpush.msra.mxu0 %v51
    %275 = vmatpush.msra.mxu0 %v50
    %276 = vmatmul.f32.gmra.mxu0 %v258
    %v277 = vpop.f32.mrf.mxu0
    %v278 = vadd.f32 0.0, %v277
    %279 = vdwg.mxu0
    %v280 = vadd.f32 %v254, %v278
    %v281 = vxor.u32 %v280, 2147483648
    %v282 = vmul.f32 %v281, 1.442695
    %v283 = vpow.pop %v282
    %v284 = vadd.f32 %v283, 1.0
    %v285 = vrcp.pop %v284
    %v286 = vmul.f32 %v284, %v285
    %v287 = vsub.f32 1.0, %v286
    %v288 = vmul.f32 %v285, %v287
    %v289 = vadd.f32 %v285, %v288
    %vm290 = vweird.f32 %v284
    %vm291 = vweird.f32 %v285
    %vm292 = vmor %vm290, %vm291
    %v293 = vsel %vm292, %v285, %v289
    %v294 = vand.u32 2147483647, %v284
    %vm295 = vcmp.eq.f32.partialorder %v294, 8.507059e+37
    %v296 = vand.u32 %v284, 2147483648
    %v297 = vor.u32 1.1754944e-38, %v296
    %v298 = vsel %vm295, %v297, %v293
    %v299 = vmul.f32 1.0, %v298
    %v300 = vtanh.pop %v280
    %v301 = vmul.f32 %v299, %v246
    %303 = vrot.lane.b32.xlu0 %v300, 64
    %v304 = vpop.permute.xlu0 %303
    %v306 = vmul.f32 %v299, %v304
    %308 = vrot.lane.b32.xlu0 %v306, 32
    %v309 = vpop.permute.xlu0 %308
    %v311 = vadd.f32 %v301, %v309
    %v312 = vtanh.pop %v311
    %314 = vrot.lane.b32.xlu0 %v312, 64
    %v315 = vpop.permute.xlu0 %314
    %v317 = vmul.f32 %v299, %v315
    %s318 = scalar_lea.vmem %s0, 8
    %v319 = vld [vmem:[%s318] sm:$0x3]
    %321 = vrot.lane.b32.xlu0 %v317, 32
    %v322 = vpop.permute.xlu0 %321
    %v323 = vsel %vm57, %v322, 0
    %325 = vmatpush.msra.mxu0 0.0
    %326 = vmatpush.msra.mxu0 0.0
    %327 = vmatpush.msra.mxu0 0.0
    %328 = vmatpush.msra.mxu0 0.0
    %329 = vmatpush.msra.mxu0 0.0
    %330 = vmatpush.msra.mxu0 0.0
    %331 = vmatpush.msra.mxu0 0.0
    %332 = vmatpush.msra.mxu0 0.0
    %333 = vmatpush.msra.mxu0 0.0
    %334 = vmatpush.msra.mxu0 0.0
    %335 = vmatpush.msra.mxu0 0.0
    %336 = vmatpush.msra.mxu0 0.0
    %337 = vmatpush.msra.mxu0 %v53
    %338 = vmatpush.msra.mxu0 %v52
    %339 = vmatpush.msra.mxu0 %v51
    %340 = vmatpush.msra.mxu0 %v50
    %341 = vmatmul.f32.gmra.mxu0 %v323
    %v342 = vpop.f32.mrf.mxu0
    %v343 = vadd.f32 0.0, %v342
    %344 = vdwg.mxu0
    %v345 = vadd.f32 %v319, %v343
    %v346 = vxor.u32 %v345, 2147483648
    %v347 = vmul.f32 %v346, 1.442695
    %v348 = vpow.pop %v347
    %v349 = vadd.f32 %v348, 1.0
    %v350 = vrcp.pop %v349
    %v351 = vmul.f32 %v349, %v350
    %v352 = vsub.f32 1.0, %v351
    %v353 = vmul.f32 %v350, %v352
    %v354 = vadd.f32 %v350, %v353
    %vm355 = vweird.f32 %v349
    %vm356 = vweird.f32 %v350
    %vm357 = vmor %vm355, %vm356
    %v358 = vsel %vm357, %v350, %v354
    %v359 = vand.u32 2147483647, %v349
    %vm360 = vcmp.eq.f32.partialorder %v359, 8.507059e+37
    %v361 = vand.u32 %v349, 2147483648
    %v362 = vor.u32 1.1754944e-38, %v361
    %v363 = vsel %vm360, %v362, %v358
    %v364 = vmul.f32 1.0, %v363
    %v365 = vtanh.pop %v345
    %v366 = vmul.f32 %v364, %v311
    %368 = vrot.lane.b32.xlu0 %v365, 64
    %v369 = vpop.permute.xlu0 %368
    %v371 = vmul.f32 %v364, %v369
    %373 = vrot.lane.b32.xlu0 %v371, 32
    %v374 = vpop.permute.xlu0 %373
    %v376 = vadd.f32 %v366, %v374
    %v377 = vtanh.pop %v376
    %379 = vrot.lane.b32.xlu0 %v377, 64
    %v380 = vpop.permute.xlu0 %379
    %v382 = vmul.f32 %v364, %v380
    %s383 = scalar_lea.vmem %s0, 10
    %v384 = vld [vmem:[%s383] sm:$0x3]
    %386 = vrot.lane.b32.xlu0 %v382, 32
    %v387 = vpop.permute.xlu0 %386
    %v388 = vsel %vm57, %v387, 0
    %390 = vmatpush.msra.mxu0 0.0
    %391 = vmatpush.msra.mxu0 0.0
    %392 = vmatpush.msra.mxu0 0.0
    %393 = vmatpush.msra.mxu0 0.0
    %394 = vmatpush.msra.mxu0 0.0
    %395 = vmatpush.msra.mxu0 0.0
    %396 = vmatpush.msra.mxu0 0.0
    %397 = vmatpush.msra.mxu0 0.0
    %398 = vmatpush.msra.mxu0 0.0
    %399 = vmatpush.msra.mxu0 0.0
    %400 = vmatpush.msra.mxu0 0.0
    %401 = vmatpush.msra.mxu0 0.0
    %402 = vmatpush.msra.mxu0 %v53
    %403 = vmatpush.msra.mxu0 %v52
    %404 = vmatpush.msra.mxu0 %v51
    %405 = vmatpush.msra.mxu0 %v50
    %406 = vmatmul.f32.gmra.mxu0 %v388
    %v407 = vpop.f32.mrf.mxu0
    %v408 = vadd.f32 0.0, %v407
    %409 = vdwg.mxu0
    %v410 = vadd.f32 %v384, %v408
    %v411 = vxor.u32 %v410, 2147483648
    %v412 = vmul.f32 %v411, 1.442695
    %v413 = vpow.pop %v412
    %v414 = vadd.f32 %v413, 1.0
    %v415 = vrcp.pop %v414
    %v416 = vmul.f32 %v414, %v415
    %v417 = vsub.f32 1.0, %v416
    %v418 = vmul.f32 %v415, %v417
    %v419 = vadd.f32 %v415, %v418
    %vm420 = vweird.f32 %v414
    %vm421 = vweird.f32 %v415
    %vm422 = vmor %vm420, %vm421
    %v423 = vsel %vm422, %v415, %v419
    %v424 = vand.u32 2147483647, %v414
    %vm425 = vcmp.eq.f32.partialorder %v424, 8.507059e+37
    %v426 = vand.u32 %v414, 2147483648
    %v427 = vor.u32 1.1754944e-38, %v426
    %v428 = vsel %vm425, %v427, %v423
    %v429 = vmul.f32 1.0, %v428
    %v430 = vtanh.pop %v410
    %v431 = vmul.f32 %v429, %v376
    %433 = vrot.lane.b32.xlu0 %v430, 64
    %v434 = vpop.permute.xlu0 %433
    %v436 = vmul.f32 %v429, %v434
    %438 = vrot.lane.b32.xlu0 %v436, 32
    %v439 = vpop.permute.xlu0 %438
    %v441 = vadd.f32 %v431, %v439
    %v442 = vtanh.pop %v441
    %444 = vrot.lane.b32.xlu0 %v442, 64
    %v445 = vpop.permute.xlu0 %444
    %v447 = vmul.f32 %v429, %v445
    %s448 = scalar_lea.vmem %s0, 12
    %v449 = vld [vmem:[%s448] sm:$0x3]
    %451 = vrot.lane.b32.xlu0 %v447, 32
    %v452 = vpop.permute.xlu0 %451
    %v453 = vsel %vm57, %v452, 0
    %455 = vmatpush.msra.mxu0 0.0
    %456 = vmatpush.msra.mxu0 0.0
    %457 = vmatpush.msra.mxu0 0.0
    %458 = vmatpush.msra.mxu0 0.0
    %459 = vmatpush.msra.mxu0 0.0
    %460 = vmatpush.msra.mxu0 0.0
    %461 = vmatpush.msra.mxu0 0.0
    %462 = vmatpush.msra.mxu0 0.0
    %463 = vmatpush.msra.mxu0 0.0
    %464 = vmatpush.msra.mxu0 0.0
    %465 = vmatpush.msra.mxu0 0.0
    %466 = vmatpush.msra.mxu0 0.0
    %467 = vmatpush.msra.mxu0 %v53
    %468 = vmatpush.msra.mxu0 %v52
    %469 = vmatpush.msra.mxu0 %v51
    %470 = vmatpush.msra.mxu0 %v50
    %471 = vmatmul.f32.gmra.mxu0 %v453
    %v472 = vpop.f32.mrf.mxu0
    %v473 = vadd.f32 0.0, %v472
    %474 = vdwg.mxu0
    %v475 = vadd.f32 %v449, %v473
    %v476 = vxor.u32 %v475, 2147483648
    %v477 = vmul.f32 %v476, 1.442695
    %v478 = vpow.pop %v477
    %v479 = vadd.f32 %v478, 1.0
    %v480 = vrcp.pop %v479
    %v481 = vmul.f32 %v479, %v480
    %v482 = vsub.f32 1.0, %v481
    %v483 = vmul.f32 %v480, %v482
    %v484 = vadd.f32 %v480, %v483
    %vm485 = vweird.f32 %v479
    %vm486 = vweird.f32 %v480
    %vm487 = vmor %vm485, %vm486
    %v488 = vsel %vm487, %v480, %v484
    %v489 = vand.u32 2147483647, %v479
    %vm490 = vcmp.eq.f32.partialorder %v489, 8.507059e+37
    %v491 = vand.u32 %v479, 2147483648
    %v492 = vor.u32 1.1754944e-38, %v491
    %v493 = vsel %vm490, %v492, %v488
    %v494 = vmul.f32 1.0, %v493
    %v495 = vtanh.pop %v475
    %v496 = vmul.f32 %v494, %v441
    %498 = vrot.lane.b32.xlu0 %v495, 64
    %v499 = vpop.permute.xlu0 %498
    %v501 = vmul.f32 %v494, %v499
    %503 = vrot.lane.b32.xlu0 %v501, 32
    %v504 = vpop.permute.xlu0 %503
    %v506 = vadd.f32 %v496, %v504
    %v507 = vtanh.pop %v506
    %509 = vrot.lane.b32.xlu0 %v507, 64
    %v510 = vpop.permute.xlu0 %509
    %v512 = vmul.f32 %v494, %v510
    %s513 = scalar_lea.vmem %s0, 14
    %v514 = vld [vmem:[%s513] sm:$0x3]
    %516 = vrot.lane.b32.xlu0 %v512, 32
    %v517 = vpop.permute.xlu0 %516
    %v518 = vsel %vm57, %v517, 0
    %520 = vmatpush.msra.mxu0 0.0
    %521 = vmatpush.msra.mxu0 0.0
    %522 = vmatpush.msra.mxu0 0.0
    %523 = vmatpush.msra.mxu0 0.0
    %524 = vmatpush.msra.mxu0 0.0
    %525 = vmatpush.msra.mxu0 0.0
    %526 = vmatpush.msra.mxu0 0.0
    %527 = vmatpush.msra.mxu0 0.0
    %528 = vmatpush.msra.mxu0 0.0
    %529 = vmatpush.msra.mxu0 0.0
    %530 = vmatpush.msra.mxu0 0.0
    %531 = vmatpush.msra.mxu0 0.0
    %532 = vmatpush.msra.mxu0 %v53
    %533 = vmatpush.msra.mxu0 %v52
    %534 = vmatpush.msra.mxu0 %v51
    %535 = vmatpush.msra.mxu0 %v50
    %536 = vmatmul.f32.gmra.mxu0 %v518
    %v537 = vpop.f32.mrf.mxu0
    %v538 = vadd.f32 0.0, %v537
    %539 = vdwg.mxu0
    %v540 = vadd.f32 %v514, %v538
    %v541 = vxor.u32 %v540, 2147483648
    %v542 = vmul.f32 %v541, 1.442695
    %v543 = vpow.pop %v542
    %v544 = vadd.f32 %v543, 1.0
    %v545 = vrcp.pop %v544
    %v546 = vmul.f32 %v544, %v545
    %v547 = vsub.f32 1.0, %v546
    %v548 = vmul.f32 %v545, %v547
    %v549 = vadd.f32 %v545, %v548
    %vm550 = vweird.f32 %v544
    %vm551 = vweird.f32 %v545
    %vm552 = vmor %vm550, %vm551
    %v553 = vsel %vm552, %v545, %v549
    %v554 = vand.u32 2147483647, %v544
    %vm555 = vcmp.eq.f32.partialorder %v554, 8.507059e+37
    %v556 = vand.u32 %v544, 2147483648
    %v557 = vor.u32 1.1754944e-38, %v556
    %v558 = vsel %vm555, %v557, %v553
    %v559 = vmul.f32 1.0, %v558
    %v560 = vtanh.pop %v540
    %v561 = vmul.f32 %v559, %v506
    %563 = vrot.lane.b32.xlu0 %v560, 64
    %v564 = vpop.permute.xlu0 %563
    %v566 = vmul.f32 %v559, %v564
    %568 = vrot.lane.b32.xlu0 %v566, 32
    %v569 = vpop.permute.xlu0 %568
    %v571 = vadd.f32 %v561, %v569
    %v572 = vtanh.pop %v571
    %574 = vrot.lane.b32.xlu0 %v572, 64
    %v575 = vpop.permute.xlu0 %574
    %v577 = vmul.f32 %v559, %v575
    %579 = vrot.lane.b32.xlu0 %v577, 32
    %v580 = vpop.permute.xlu0 %579
    %vm582 = vcmask 254976
    %583 = vst.msk [vmem:[#allocation3] sm:$0x3] %vm582, %v580
    %585 = vrot.lane.b32.xlu0 %v571, 96
    %v586 = vpop.permute.xlu0 %585
    %588 = vst.msk [vmem:[#allocation4] sm:$0x3] %vm582, %v586
    // Predicated region
    $region37: #{lstm_forward.7} parent=1 // pred_check
      %p589 = pneg %p16
    $region38: #{lstm_forward.7} parent=1 // pred_check_branch
      %591 = sbr.rel (%p589) target = $region40
    $region39: #{lstm_forward.7} parent=1 // pred_region
      %v592 = vld [vmem:[%s2] sm:$0xff]
      %v593 = vld [vmem:[%s2 + $0x8] sm:$0xff]
      %v594 = vld [vmem:[%s2 + $0x10] sm:$0xff]
      %v595 = vld [vmem:[%s2 + $0x18] sm:$0xff]
      %v596 = vld [vmem:[%s3] sm:$0x1]
      %v598 = vperm.slane %v596, 0
      %v600 = vsel %vm57, %v580, 0
      %602 = vmatpush.msra.mxu0 0.0
      %603 = vmatpush.msra.mxu0 0.0
      %604 = vmatpush.msra.mxu0 0.0
      %605 = vmatpush.msra.mxu0 0.0
      %606 = vmatpush.msra.mxu0 0.0
      %607 = vmatpush.msra.mxu0 0.0
      %608 = vmatpush.msra.mxu0 0.0
      %609 = vmatpush.msra.mxu0 0.0
      %610 = vmatpush.msra.mxu0 0.0
      %611 = vmatpush.msra.mxu0 0.0
      %612 = vmatpush.msra.mxu0 0.0
      %613 = vmatpush.msra.mxu0 0.0
      %614 = vmatpush.msra.mxu0 %v595
      %615 = vmatpush.msra.mxu0 %v594
      %616 = vmatpush.msra.mxu0 %v593
      %617 = vmatpush.msra.mxu0 %v592
      %618 = vmatmul.f32.gmra.mxu0 %v600
      %v619 = vpop.f32.mrf.mxu0
      %v620 = vadd.f32 %v598, %v619
      %621 = vdwg.mxu0
      %vm622 = vcmask 17408
      %623 = vst.msk [vmem:[#allocation6] sm:$0x3] %vm622, %v620
    $region40: #{lstm_forward.7} parent=1 // pred_fallthru
      _
    // Predicated region
    $region41: #{lstm_forward.7} parent=1 // pred_check
      _
    $region42: #{lstm_forward.7} parent=1 // pred_check_branch
      %625 = sbr.rel (0) target = $region44
    $region43: #{lstm_forward.7} parent=1 // pred_region
      %627 = vsyncadd [#allocation7], 0
      %s629 = sshll.u32 [#allocation6], 4
      %s630 = int_to_ptr.vmem [resolvable:$true] %s629
      %s631 = sshll.u32 %s4, 4
      %s632 = int_to_ptr.hbm [resolvable:$true] %s631
      %634 = dma.vmem_to_hbm [thread:$0]  %s630, 32, %s632, [#allocation7]
    $region44: #{lstm_forward.7} parent=1 // pred_fallthru
      _
    // Predicated region
    $region45: #{lstm_forward.7} parent=1 // pred_check
      _
    $region46: #{lstm_forward.7} parent=1 // pred_check_branch
      %636 = sbr.rel (0) target = $region48
    $region47: #{lstm_forward.7} parent=1 // pred_region
      %638 = dma.done [#allocation7], 32
    $region48: #{lstm_forward.7} parent=1 // pred_fallthru
      _
    %639 = vsyncpa [#allocation7], 1
  %640 = vsyncmov [#allocation5]
  %s641 = vpop.sfrf %640
  %p642 = scmp.eq.s32.totalorder %s641, 0
  %p643 = pneg %p642
  %645 = shalt.err (%p643)

</llo_original>
